<compile_context>
chip_gen: v6e
topology: v6e:2x2x1
jax: 0.10.0
libtpu: 0.0.40
codegen_flags: <defaults>
</compile_context>

<pallas_src>
import jax
import jax.numpy as jnp
from jax.experimental import pallas as pl
from jax.experimental.pallas import tpu as pltpu

BN_EPS = 1e-5


def _fused_kernel(x_ref, g_ref, w_ref, gamma_ref, beta_ref, o_ref):
    # x_ref:     (Cin, M)    activations, channels-major (free view of NCHW, N==1)
    # g_ref:     (1, Cin)    SE gate logits
    # w_ref:     (Cout, Cin) 1x1 conv weight (un-transposed)
    # gamma_ref: (Cout, 1)
    # beta_ref:  (Cout, 1)
    # o_ref:     (Cout, M)
    gate = jax.nn.sigmoid(g_ref[...])                      # (1, Cin), EUP, f32
    w_eff = w_ref[...] * gate                              # fold gate into weight (VPU, small)
    y = jnp.dot(w_eff, x_ref[...],
                preferred_element_type=jnp.float32)        # MXU: (Cout, Cin) @ (Cin, M)

    # BatchNorm2d (train mode): biased batch stats over the spatial/batch axis (M).
    # One reduction pass: mean and E[y^2] together, all in f32.
    mean = jnp.mean(y, axis=1, keepdims=True)              # (Cout, 1)
    mean_sq = jnp.mean(y * y, axis=1, keepdims=True)       # (Cout, 1)
    var = mean_sq - mean * mean
    scale = gamma_ref[...] * jax.lax.rsqrt(var + BN_EPS)   # (Cout, 1)
    bias = beta_ref[...] - mean * scale                    # (Cout, 1)
    o_ref[...] = (y * scale + bias).astype(o_ref.dtype)


def fused_sigmoid_mul_conv1x1_bn(x297, x301, conv_w, gamma, beta):
    """x297: (N, Cin, H, W), x301: (N, Cin, 1, 1), conv_w: (Cout, Cin, 1, 1)."""
    N, Cin, H, W = x297.shape
    Cout = conv_w.shape[0]
    M = H * W

    # TODO(synk): layout trick and single gate row assume N == 1 (as in the module);
    # N > 1 would need a batch grid axis and per-sample gates + cross-sample BN stats.
    assert N == 1, "fused kernel specialized for batch size 1"

    # All of these are free views (no data movement):
    x_cm = x297.reshape(Cin, M)          # NCHW, N==1 -> (Cin, H*W)
    gate = x301.reshape(1, Cin)          # (1, Cin, 1, 1) -> (1, Cin)
    w_mat = conv_w.reshape(Cout, Cin)    # (Cout, Cin, 1, 1) -> (Cout, Cin)
    gamma_c = gamma.reshape(Cout, 1)
    beta_c = beta.reshape(Cout, 1)

    out_cm = pl.pallas_call(
        _fused_kernel,
        out_shape=jax.ShapeDtypeStruct((Cout, M), x297.dtype),
        in_specs=[
            pl.BlockSpec(memory_space=pltpu.VMEM),   # x (Cin, M)
            pl.BlockSpec(memory_space=pltpu.VMEM),   # gate (1, Cin)
            pl.BlockSpec(memory_space=pltpu.VMEM),   # weight (Cout, Cin)
            pl.BlockSpec(memory_space=pltpu.VMEM),   # gamma (Cout, 1)
            pl.BlockSpec(memory_space=pltpu.VMEM),   # beta (Cout, 1)
        ],
        out_specs=pl.BlockSpec(memory_space=pltpu.VMEM),
    )(x_cm, gate, w_mat, gamma_c, beta_c)

    # (Cout, H*W) -> (1, Cout, H, W): free view, no transpose.
    return out_cm.reshape(N, Cout, H, W)


def reference(x297, x301, conv_w, gamma, beta):
    gate = jax.nn.sigmoid(x301)
    xg = x297 * gate
    # 1x1 conv as einsum over channels
    y = jnp.einsum('nchw,oc->nohw', xg,
                   conv_w.reshape(conv_w.shape[0], conv_w.shape[1]))
    mean = jnp.mean(y, axis=(0, 2, 3), keepdims=True)
    var = jnp.mean((y - mean) ** 2, axis=(0, 2, 3), keepdims=True)
    return gamma.reshape(1, -1, 1, 1) * (y - mean) * jax.lax.rsqrt(var + BN_EPS) \
        + beta.reshape(1, -1, 1, 1)


if __name__ == "__main__":
    key = jax.random.PRNGKey(0)
    k1, k2, k3 = jax.random.split(key, 3)

    N, Cin, Cout, H, W = 1, 960, 160, 14, 14

    # deterministic inputs / parameters (no checkpoint load)
    x297 = jax.random.normal(k1, (N, Cin, H, W), dtype=jnp.float32)
    x301 = jax.random.normal(k2, (N, Cin, 1, 1), dtype=jnp.float32)
    conv_w = jax.random.normal(k3, (Cout, Cin, 1, 1), dtype=jnp.float32) * 0.02
    gamma = jnp.ones((Cout,), dtype=jnp.float32)    # BatchNorm2d default init
    beta = jnp.zeros((Cout,), dtype=jnp.float32)

    # TODO(synk): BatchNorm2d in train mode also updates running_mean/running_var;
    # only the normalized forward output is produced here.
    out = fused_sigmoid_mul_conv1x1_bn(x297, x301, conv_w, gamma, beta)
    out = jax.block_until_ready(out)

    ref = reference(x297, x301, conv_w, gamma, beta)
    assert out.shape == (N, Cout, H, W)
    assert jnp.allclose(out, ref, atol=1e-2, rtol=1e-3), float(jnp.max(jnp.abs(out - ref)))

    print("KERNEL_OK")
</pallas_src>

<mosaic_0001>
module attributes {stable_mosaic.version = 11 : i64} {
  func.func @_fused_kernel(%arg0: memref<960x196xf32, #tpu.memory_space<vmem>>, %arg1: memref<1x960xf32, #tpu.memory_space<vmem>>, %arg2: memref<160x960xf32, #tpu.memory_space<vmem>>, %arg3: memref<160x1xf32, #tpu.memory_space<vmem>>, %arg4: memref<160x1xf32, #tpu.memory_space<vmem>>, %arg5: memref<160x196xf32, #tpu.memory_space<vmem>>) attributes {dimension_semantics = [], scalar_prefetch = 0 : i64, scratch_operands = 0 : i64, tpu.core_type = #tpu.core_type<tc>} {
    %c0 = arith.constant 0 : index
    %c0_0 = arith.constant 0 : index
    %0 = vector.load %arg1[%c0, %c0_0] : memref<1x960xf32, #tpu.memory_space<vmem>>, vector<1x960xf32>
    %1 = arith.negf %0 : vector<1x960xf32>
    %2 = math.exp %1 : vector<1x960xf32>
    %cst = arith.constant 1.000000e+00 : f32
    %3 = vector.broadcast %cst : f32 to vector<1x960xf32>
    %4 = arith.addf %3, %2 : vector<1x960xf32>
    %5 = arith.divf %3, %4 : vector<1x960xf32>
    %c0_1 = arith.constant 0 : index
    %c0_2 = arith.constant 0 : index
    %6 = vector.load %arg2[%c0_1, %c0_2] : memref<160x960xf32, #tpu.memory_space<vmem>>, vector<160x960xf32>
    %7 = vector.broadcast %5 : vector<1x960xf32> to vector<160x960xf32>
    %8 = arith.mulf %6, %7 : vector<160x960xf32>
    %c0_3 = arith.constant 0 : index
    %c0_4 = arith.constant 0 : index
    %9 = vector.load %arg0[%c0_3, %c0_4] : memref<960x196xf32, #tpu.memory_space<vmem>>, vector<960x196xf32>
    %cst_5 = arith.constant dense<0.000000e+00> : vector<160x196xf32>
    %10 = tpu.matmul %8, %9, %cst_5 {dimension_numbers = #tpu.dot_dimension_numbers<[1], [0], [0], [1], [0, 0, 1, 1], [], []>} : vector<160x960xf32>, vector<960x196xf32>, vector<160x196xf32> -> vector<160x196xf32>
    %cst_6 = arith.constant dense<0.000000e+00> : vector<160xf32>
    %11 = vector.multi_reduction <add>, %10, %cst_6 [1] : vector<160x196xf32> to vector<160xf32>
    %12 = vector.shape_cast %11 : vector<160xf32> to vector<160x1xf32>
    %cst_7 = arith.constant 1.960000e+02 : f32
    %13 = vector.broadcast %cst_7 : f32 to vector<160x1xf32>
    %14 = arith.divf %12, %13 : vector<160x1xf32>
    %15 = arith.mulf %10, %10 : vector<160x196xf32>
    %cst_8 = arith.constant dense<0.000000e+00> : vector<160xf32>
    %16 = vector.multi_reduction <add>, %15, %cst_8 [1] : vector<160x196xf32> to vector<160xf32>
    %17 = vector.shape_cast %16 : vector<160xf32> to vector<160x1xf32>
    %cst_9 = arith.constant 1.960000e+02 : f32
    %18 = vector.broadcast %cst_9 : f32 to vector<160x1xf32>
    %19 = arith.divf %17, %18 : vector<160x1xf32>
    %20 = arith.mulf %14, %14 : vector<160x1xf32>
    %21 = arith.subf %19, %20 : vector<160x1xf32>
    %c0_10 = arith.constant 0 : index
    %c0_11 = arith.constant 0 : index
    %22 = vector.load %arg3[%c0_10, %c0_11] : memref<160x1xf32, #tpu.memory_space<vmem>>, vector<160x1xf32>
    %cst_12 = arith.constant 9.99999974E-6 : f32
    %23 = vector.broadcast %cst_12 : f32 to vector<160x1xf32>
    %24 = arith.addf %21, %23 : vector<160x1xf32>
    %25 = math.rsqrt %24 : vector<160x1xf32>
    %26 = arith.mulf %22, %25 : vector<160x1xf32>
    %c0_13 = arith.constant 0 : index
    %c0_14 = arith.constant 0 : index
    %27 = vector.load %arg4[%c0_13, %c0_14] : memref<160x1xf32, #tpu.memory_space<vmem>>, vector<160x1xf32>
    %28 = arith.mulf %14, %26 : vector<160x1xf32>
    %29 = arith.subf %27, %28 : vector<160x1xf32>
    %30 = vector.broadcast %26 : vector<160x1xf32> to vector<160x196xf32>
    %31 = arith.mulf %10, %30 : vector<160x196xf32>
    %32 = vector.broadcast %29 : vector<160x1xf32> to vector<160x196xf32>
    %33 = arith.addf %31, %32 : vector<160x196xf32>
    %c0_15 = arith.constant 0 : index
    %c0_16 = arith.constant 0 : index
    %34 = vector.load %arg5[%c0_15, %c0_16] : memref<160x196xf32, #tpu.memory_space<vmem>>, vector<160x196xf32>
    tpu.vector_store %arg5[%c0_15, %c0_16], %33 {strides = array<i32>} : memref<160x196xf32, #tpu.memory_space<vmem>>, vector<160x196xf32>,
    return
  }
}

</mosaic_0001>

<llo_original>
// kernel: tpu_custom_call.1
$region0: #{tpu_custom_call.1}
  #allocation0 [shape = 'u32[]', space=smem, size = 0x4, offset = 0x4, fixed_abs, tag = 'smem constant byte address 0x4 - core index']
  #allocation1 [shape = 'u32[144,128]{1,0:T(1,128)}', space=vmem, size = 0x12000, scoped, tag = 'internal scratch']
  %s0 = inlined_call_operand.vmem [shape: f32[960,196], index: 0, kind: input, shape index: {}]
  %s1 = inlined_call_operand.vmem [shape: f32[1,960], index: 1, kind: input, shape index: {}]
  %s2 = inlined_call_operand.vmem [shape: f32[160,960], index: 2, kind: input, shape index: {}]
  %s3 = inlined_call_operand.vmem [shape: f32[160,1], index: 3, kind: input, shape index: {}]
  %s4 = inlined_call_operand.vmem [shape: f32[160,1], index: 4, kind: input, shape index: {}]
  %s5 = inlined_call_operand.hbm [shape: f32[160,196], index: 5, kind: output, shape index: {}]
  %s6 = sld [smem:[#allocation0]]
  $region30: #{tpu_custom_call.1} parent=0
    _
  %s8 = ssub.s32 1, %s6
  %s9 = scalar_select 0, %s8, %s6
  $region1: #{tpu_custom_call.1} parent=0
    #allocation2 [shape = 'u8[163840]{0}', space=vmem, size = 0x28000, scoped, tag = 'output window, operand 0, single buffered']
    #allocation3 [shape = 's32[1]{0}', space=sflag, size = 0x4, scoped, tag = 'scoped memory for tpu_custom_call.1']
    %10 = vsyncpa [#allocation3], 0
    // Predicated region
    $region2: #{tpu_custom_call.1} parent=1 // pred_check
      _
    $region3: #{tpu_custom_call.1} parent=1 // pred_check_branch
      %12 = sbr.rel (0) target = $region5
    $region4: #{tpu_custom_call.1} parent=1 // pred_region
      _
    $region5: #{tpu_custom_call.1} parent=1 // pred_fallthru
      _
    // Predicated region
    $region6: #{tpu_custom_call.1} parent=1 // pred_check
      _
    $region7: #{tpu_custom_call.1} parent=1 // pred_check_branch
      %14 = sbr.rel (0) target = $region9
    $region8: #{tpu_custom_call.1} parent=1 // pred_region
      _
    $region9: #{tpu_custom_call.1} parent=1 // pred_fallthru
      _
    // Predicated region
    $region10: #{tpu_custom_call.1} parent=1 // pred_check
      _
    $region11: #{tpu_custom_call.1} parent=1 // pred_check_branch
      %16 = sbr.rel (0) target = $region13
    $region12: #{tpu_custom_call.1} parent=1 // pred_region
      _
    $region13: #{tpu_custom_call.1} parent=1 // pred_fallthru
      _
    // Predicated region
    $region14: #{tpu_custom_call.1} parent=1 // pred_check
      _
    $region15: #{tpu_custom_call.1} parent=1 // pred_check_branch
      %18 = sbr.rel (0) target = $region17
    $region16: #{tpu_custom_call.1} parent=1 // pred_region
      _
    $region17: #{tpu_custom_call.1} parent=1 // pred_fallthru
      _
    // Predicated region
    $region18: #{tpu_custom_call.1} parent=1 // pred_check
      _
    $region19: #{tpu_custom_call.1} parent=1 // pred_check_branch
      %20 = sbr.rel (0) target = $region21
    $region20: #{tpu_custom_call.1} parent=1 // pred_region
      _
    $region21: #{tpu_custom_call.1} parent=1 // pred_fallthru
      _
    %v21 = vld [vmem:[%s1] sm:$0xff]
    %v22 = vxor.u32 %v21, 2147483648
    %v23 = vmul.f32 %v22, 1.442695
    %v24 = vpow.pop %v23
    %v25 = vadd.f32 %v24, 1.0
    %v26 = vrcp.pop %v25
    %v27 = vmul.f32 1.0, %v26
    %v28 = vld [vmem:[%s2] sm:$0xff]
    %v29 = vld [vmem:[%s2 + $0x8] sm:$0xff]
    %v30 = vld [vmem:[%s2 + $0x10] sm:$0xff]
    %v31 = vld [vmem:[%s2 + $0x18] sm:$0xff]
    %v32 = vld [vmem:[%s2 + $0x20] sm:$0xff]
    %v33 = vld [vmem:[%s2 + $0x28] sm:$0xff]
    %v34 = vld [vmem:[%s2 + $0x30] sm:$0xff]
    %v35 = vld [vmem:[%s2 + $0x38] sm:$0xff]
    %v36 = vld [vmem:[%s2 + $0x40] sm:$0xff]
    %v37 = vld [vmem:[%s2 + $0x48] sm:$0xff]
    %v38 = vld [vmem:[%s2 + $0x50] sm:$0xff]
    %v39 = vld [vmem:[%s2 + $0x58] sm:$0xff]
    %v40 = vld [vmem:[%s2 + $0x60] sm:$0xff]
    %v41 = vld [vmem:[%s2 + $0x68] sm:$0xff]
    %v42 = vld [vmem:[%s2 + $0x70] sm:$0xff]
    %v43 = vld [vmem:[%s2 + $0x78] sm:$0xff]
    %v44 = vld [vmem:[%s2 + $0x80] sm:$0xff]
    %v45 = vld [vmem:[%s2 + $0x88] sm:$0xff]
    %v46 = vld [vmem:[%s2 + $0x90] sm:$0xff]
    %v47 = vld [vmem:[%s2 + $0x98] sm:$0xff]
    %v48 = vld [vmem:[%s2 + $0xa0] sm:$0xff]
    %v49 = vld [vmem:[%s2 + $0xa8] sm:$0xff]
    %v50 = vld [vmem:[%s2 + $0xb0] sm:$0xff]
    %v51 = vld [vmem:[%s2 + $0xb8] sm:$0xff]
    %v52 = vld [vmem:[%s2 + $0xc0] sm:$0xff]
    %v53 = vld [vmem:[%s2 + $0xc8] sm:$0xff]
    %v54 = vld [vmem:[%s2 + $0xd0] sm:$0xff]
    %v55 = vld [vmem:[%s2 + $0xd8] sm:$0xff]
    %v56 = vld [vmem:[%s2 + $0xe0] sm:$0xff]
    %v57 = vld [vmem:[%s2 + $0xe8] sm:$0xff]
    %v58 = vld [vmem:[%s2 + $0xf0] sm:$0xff]
    %v59 = vld [vmem:[%s2 + $0xf8] sm:$0xff]
    %v60 = vld [vmem:[%s2 + $0x100] sm:$0xff]
    %v61 = vld [vmem:[%s2 + $0x108] sm:$0xff]
    %v62 = vld [vmem:[%s2 + $0x110] sm:$0xff]
    %v63 = vld [vmem:[%s2 + $0x118] sm:$0xff]
    %v64 = vld [vmem:[%s2 + $0x120] sm:$0xff]
    %v65 = vld [vmem:[%s2 + $0x128] sm:$0xff]
    %v66 = vld [vmem:[%s2 + $0x130] sm:$0xff]
    %v67 = vld [vmem:[%s2 + $0x138] sm:$0xff]
    %v68 = vld [vmem:[%s2 + $0x140] sm:$0xff]
    %v69 = vld [vmem:[%s2 + $0x148] sm:$0xff]
    %v70 = vld [vmem:[%s2 + $0x150] sm:$0xff]
    %v71 = vld [vmem:[%s2 + $0x158] sm:$0xff]
    %v72 = vld [vmem:[%s2 + $0x160] sm:$0xff]
    %v73 = vld [vmem:[%s2 + $0x168] sm:$0xff]
    %v74 = vld [vmem:[%s2 + $0x170] sm:$0xff]
    %v75 = vld [vmem:[%s2 + $0x178] sm:$0xff]
    %v76 = vld [vmem:[%s2 + $0x180] sm:$0xff]
    %v77 = vld [vmem:[%s2 + $0x188] sm:$0xff]
    %v78 = vld [vmem:[%s2 + $0x190] sm:$0xff]
    %v79 = vld [vmem:[%s2 + $0x198] sm:$0xff]
    %v80 = vld [vmem:[%s2 + $0x1a0] sm:$0xff]
    %v81 = vld [vmem:[%s2 + $0x1a8] sm:$0xff]
    %v82 = vld [vmem:[%s2 + $0x1b0] sm:$0xff]
    %v83 = vld [vmem:[%s2 + $0x1b8] sm:$0xff]
    %v84 = vld [vmem:[%s2 + $0x1c0] sm:$0xff]
    %v85 = vld [vmem:[%s2 + $0x1c8] sm:$0xff]
    %v86 = vld [vmem:[%s2 + $0x1d0] sm:$0xff]
    %v87 = vld [vmem:[%s2 + $0x1d8] sm:$0xff]
    %v88 = vld [vmem:[%s2 + $0x1e0] sm:$0xff]
    %v89 = vld [vmem:[%s2 + $0x1e8] sm:$0xff]
    %v90 = vld [vmem:[%s2 + $0x1f0] sm:$0xff]
    %v91 = vld [vmem:[%s2 + $0x1f8] sm:$0xff]
    %v92 = vld [vmem:[%s2 + $0x200] sm:$0xff]
    %v93 = vld [vmem:[%s2 + $0x208] sm:$0xff]
    %v94 = vld [vmem:[%s2 + $0x210] sm:$0xff]
    %v95 = vld [vmem:[%s2 + $0x218] sm:$0xff]
    %v96 = vld [vmem:[%s2 + $0x220] sm:$0xff]
    %v97 = vld [vmem:[%s2 + $0x228] sm:$0xff]
    %v98 = vld [vmem:[%s2 + $0x230] sm:$0xff]
    %v99 = vld [vmem:[%s2 + $0x238] sm:$0xff]
    %v100 = vld [vmem:[%s2 + $0x240] sm:$0xff]
    %v101 = vld [vmem:[%s2 + $0x248] sm:$0xff]
    %v102 = vld [vmem:[%s2 + $0x250] sm:$0xff]
    %v103 = vld [vmem:[%s2 + $0x258] sm:$0xff]
    %v104 = vld [vmem:[%s2 + $0x260] sm:$0xff]
    %v105 = vld [vmem:[%s2 + $0x268] sm:$0xff]
    %v106 = vld [vmem:[%s2 + $0x270] sm:$0xff]
    %v107 = vld [vmem:[%s2 + $0x278] sm:$0xff]
    %v108 = vld [vmem:[%s2 + $0x280] sm:$0xff]
    %v109 = vld [vmem:[%s2 + $0x288] sm:$0xff]
    %v110 = vld [vmem:[%s2 + $0x290] sm:$0xff]
    %v111 = vld [vmem:[%s2 + $0x298] sm:$0xff]
    %v112 = vld [vmem:[%s2 + $0x2a0] sm:$0xff]
    %v113 = vld [vmem:[%s2 + $0x2a8] sm:$0xff]
    %v114 = vld [vmem:[%s2 + $0x2b0] sm:$0xff]
    %v115 = vld [vmem:[%s2 + $0x2b8] sm:$0xff]
    %v116 = vld [vmem:[%s2 + $0x2c0] sm:$0xff]
    %v117 = vld [vmem:[%s2 + $0x2c8] sm:$0xff]
    %v118 = vld [vmem:[%s2 + $0x2d0] sm:$0xff]
    %v119 = vld [vmem:[%s2 + $0x2d8] sm:$0xff]
    %v120 = vld [vmem:[%s2 + $0x2e0] sm:$0xff]
    %v121 = vld [vmem:[%s2 + $0x2e8] sm:$0xff]
    %v122 = vld [vmem:[%s2 + $0x2f0] sm:$0xff]
    %v123 = vld [vmem:[%s2 + $0x2f8] sm:$0xff]
    %v124 = vld [vmem:[%s2 + $0x300] sm:$0xff]
    %v125 = vld [vmem:[%s2 + $0x308] sm:$0xff]
    %v126 = vld [vmem:[%s2 + $0x310] sm:$0xff]
    %v127 = vld [vmem:[%s2 + $0x318] sm:$0xff]
    %v128 = vld [vmem:[%s2 + $0x320] sm:$0xff]
    %v129 = vld [vmem:[%s2 + $0x328] sm:$0xff]
    %v130 = vld [vmem:[%s2 + $0x330] sm:$0xff]
    %v131 = vld [vmem:[%s2 + $0x338] sm:$0xff]
    %v132 = vld [vmem:[%s2 + $0x340] sm:$0xff]
    %v133 = vld [vmem:[%s2 + $0x348] sm:$0xff]
    %v134 = vld [vmem:[%s2 + $0x350] sm:$0xff]
    %v135 = vld [vmem:[%s2 + $0x358] sm:$0xff]
    %v136 = vld [vmem:[%s2 + $0x360] sm:$0xff]
    %v137 = vld [vmem:[%s2 + $0x368] sm:$0xff]
    %v138 = vld [vmem:[%s2 + $0x370] sm:$0xff]
    %v139 = vld [vmem:[%s2 + $0x378] sm:$0xff]
    %v140 = vld [vmem:[%s2 + $0x380] sm:$0xff]
    %v141 = vld [vmem:[%s2 + $0x388] sm:$0xff]
    %v142 = vld [vmem:[%s2 + $0x390] sm:$0xff]
    %v143 = vld [vmem:[%s2 + $0x398] sm:$0xff]
    %v144 = vld [vmem:[%s2 + $0x3a0] sm:$0xff]
    %v145 = vld [vmem:[%s2 + $0x3a8] sm:$0xff]
    %v146 = vld [vmem:[%s2 + $0x3b0] sm:$0xff]
    %v147 = vld [vmem:[%s2 + $0x3b8] sm:$0xff]
    %v148 = vld [vmem:[%s2 + $0x3c0] sm:$0xff]
    %v149 = vld [vmem:[%s2 + $0x3c8] sm:$0xff]
    %v150 = vld [vmem:[%s2 + $0x3d0] sm:$0xff]
    %v151 = vld [vmem:[%s2 + $0x3d8] sm:$0xff]
    %v152 = vld [vmem:[%s2 + $0x3e0] sm:$0xff]
    %v153 = vld [vmem:[%s2 + $0x3e8] sm:$0xff]
    %v154 = vld [vmem:[%s2 + $0x3f0] sm:$0xff]
    %v155 = vld [vmem:[%s2 + $0x3f8] sm:$0xff]
    %v156 = vld [vmem:[%s2 + $0x400] sm:$0xff]
    %v157 = vld [vmem:[%s2 + $0x408] sm:$0xff]
    %v158 = vld [vmem:[%s2 + $0x410] sm:$0xff]
    %v159 = vld [vmem:[%s2 + $0x418] sm:$0xff]
    %v160 = vld [vmem:[%s2 + $0x420] sm:$0xff]
    %v161 = vld [vmem:[%s2 + $0x428] sm:$0xff]
    %v162 = vld [vmem:[%s2 + $0x430] sm:$0xff]
    %v163 = vld [vmem:[%s2 + $0x438] sm:$0xff]
    %v164 = vld [vmem:[%s2 + $0x440] sm:$0xff]
    %v165 = vld [vmem:[%s2 + $0x448] sm:$0xff]
    %v166 = vld [vmem:[%s2 + $0x450] sm:$0xff]
    %v167 = vld [vmem:[%s2 + $0x458] sm:$0xff]
    %v168 = vld [vmem:[%s2 + $0x460] sm:$0xff]
    %v169 = vld [vmem:[%s2 + $0x468] sm:$0xff]
    %v170 = vld [vmem:[%s2 + $0x470] sm:$0xff]
    %v171 = vld [vmem:[%s2 + $0x478] sm:$0xff]
    %v172 = vld [vmem:[%s2 + $0x480] sm:$0xff]
    %v173 = vld [vmem:[%s2 + $0x488] sm:$0xff]
    %v174 = vld [vmem:[%s2 + $0x490] sm:$0xff]
    %v175 = vld [vmem:[%s2 + $0x498] sm:$0xff]
    %v176 = vld [vmem:[%s2 + $0x4a0] sm:$0xff]
    %v177 = vld [vmem:[%s2 + $0x4a8] sm:$0xff]
    %v178 = vld [vmem:[%s2 + $0x4b0] sm:$0xff]
    %v179 = vld [vmem:[%s2 + $0x4b8] sm:$0xff]
    %v180 = vld [vmem:[%s2 + $0x4c0] sm:$0xff]
    %v181 = vld [vmem:[%s2 + $0x4c8] sm:$0xff]
    %v182 = vld [vmem:[%s2 + $0x4d0] sm:$0xff]
    %v183 = vld [vmem:[%s2 + $0x4d8] sm:$0xff]
    %v184 = vld [vmem:[%s2 + $0x4e0] sm:$0xff]
    %v185 = vld [vmem:[%s2 + $0x4e8] sm:$0xff]
    %v186 = vld [vmem:[%s2 + $0x4f0] sm:$0xff]
    %v187 = vld [vmem:[%s2 + $0x4f8] sm:$0xff]
    %v189 = vlaneseq
    %v190 = vshrl.u32 %v189, 7
    %v191 = vsub.s32 0, %v190
    %v192 = vrot.slane %v27, %v191
    %v193 = vlaneseq
    %v194 = vshrl.u32 %v193, 7
    %v195 = vsub.s32 1, %v194
    %v196 = vrot.slane %v27, %v195
    %v197 = vlaneseq
    %v198 = vshrl.u32 %v197, 7
    %v199 = vsub.s32 2, %v198
    %v200 = vrot.slane %v27, %v199
    %v201 = vlaneseq
    %v202 = vshrl.u32 %v201, 7
    %v203 = vsub.s32 3, %v202
    %v204 = vrot.slane %v27, %v203
    %v205 = vlaneseq
    %v206 = vshrl.u32 %v205, 7
    %v207 = vsub.s32 4, %v206
    %v208 = vrot.slane %v27, %v207
    %v209 = vlaneseq
    %v210 = vshrl.u32 %v209, 7
    %v211 = vsub.s32 5, %v210
    %v212 = vrot.slane %v27, %v211
    %v213 = vlaneseq
    %v214 = vshrl.u32 %v213, 7
    %v215 = vsub.s32 6, %v214
    %v216 = vrot.slane %v27, %v215
    %v217 = vlaneseq
    %v218 = vshrl.u32 %v217, 7
    %v219 = vsub.s32 7, %v218
    %v220 = vrot.slane %v27, %v219
    %v229 = vmul.f32 %v28, %v192
    %v230 = vmul.f32 %v29, %v196
    %v231 = vmul.f32 %v30, %v200
    %v232 = vmul.f32 %v31, %v204
    %v233 = vmul.f32 %v32, %v208
    %v234 = vmul.f32 %v33, %v212
    %v235 = vmul.f32 %v34, %v216
    %v236 = vmul.f32 %v35, %v220
    %v237 = vmul.f32 %v36, %v192
    %v238 = vmul.f32 %v37, %v196
    %v239 = vmul.f32 %v38, %v200
    %v240 = vmul.f32 %v39, %v204
    %v241 = vmul.f32 %v40, %v208
    %v242 = vmul.f32 %v41, %v212
    %v243 = vmul.f32 %v42, %v216
    %v244 = vmul.f32 %v43, %v220
    %v245 = vmul.f32 %v44, %v192
    %v246 = vmul.f32 %v45, %v196
    %v247 = vmul.f32 %v46, %v200
    %v248 = vmul.f32 %v47, %v204
    %v249 = vmul.f32 %v48, %v208
    %v250 = vmul.f32 %v49, %v212
    %v251 = vmul.f32 %v50, %v216
    %v252 = vmul.f32 %v51, %v220
    %v253 = vmul.f32 %v52, %v192
    %v254 = vmul.f32 %v53, %v196
    %v255 = vmul.f32 %v54, %v200
    %v256 = vmul.f32 %v55, %v204
    %v257 = vmul.f32 %v56, %v208
    %v258 = vmul.f32 %v57, %v212
    %v259 = vmul.f32 %v58, %v216
    %v260 = vmul.f32 %v59, %v220
    %v261 = vmul.f32 %v60, %v192
    %v262 = vmul.f32 %v61, %v196
    %v263 = vmul.f32 %v62, %v200
    %v264 = vmul.f32 %v63, %v204
    %v265 = vmul.f32 %v64, %v208
    %v266 = vmul.f32 %v65, %v212
    %v267 = vmul.f32 %v66, %v216
    %v268 = vmul.f32 %v67, %v220
    %v269 = vmul.f32 %v68, %v192
    %v270 = vmul.f32 %v69, %v196
    %v271 = vmul.f32 %v70, %v200
    %v272 = vmul.f32 %v71, %v204
    %v273 = vmul.f32 %v72, %v208
    %v274 = vmul.f32 %v73, %v212
    %v275 = vmul.f32 %v74, %v216
    %v276 = vmul.f32 %v75, %v220
    %v277 = vmul.f32 %v76, %v192
    %v278 = vmul.f32 %v77, %v196
    %v279 = vmul.f32 %v78, %v200
    %v280 = vmul.f32 %v79, %v204
    %v281 = vmul.f32 %v80, %v208
    %v282 = vmul.f32 %v81, %v212
    %v283 = vmul.f32 %v82, %v216
    %v284 = vmul.f32 %v83, %v220
    %v285 = vmul.f32 %v84, %v192
    %v286 = vmul.f32 %v85, %v196
    %v287 = vmul.f32 %v86, %v200
    %v288 = vmul.f32 %v87, %v204
    %v289 = vmul.f32 %v88, %v208
    %v290 = vmul.f32 %v89, %v212
    %v291 = vmul.f32 %v90, %v216
    %v292 = vmul.f32 %v91, %v220
    %v293 = vmul.f32 %v92, %v192
    %v294 = vmul.f32 %v93, %v196
    %v295 = vmul.f32 %v94, %v200
    %v296 = vmul.f32 %v95, %v204
    %v297 = vmul.f32 %v96, %v208
    %v298 = vmul.f32 %v97, %v212
    %v299 = vmul.f32 %v98, %v216
    %v300 = vmul.f32 %v99, %v220
    %v301 = vmul.f32 %v100, %v192
    %v302 = vmul.f32 %v101, %v196
    %v303 = vmul.f32 %v102, %v200
    %v304 = vmul.f32 %v103, %v204
    %v305 = vmul.f32 %v104, %v208
    %v306 = vmul.f32 %v105, %v212
    %v307 = vmul.f32 %v106, %v216
    %v308 = vmul.f32 %v107, %v220
    %v309 = vmul.f32 %v108, %v192
    %v310 = vmul.f32 %v109, %v196
    %v311 = vmul.f32 %v110, %v200
    %v312 = vmul.f32 %v111, %v204
    %v313 = vmul.f32 %v112, %v208
    %v314 = vmul.f32 %v113, %v212
    %v315 = vmul.f32 %v114, %v216
    %v316 = vmul.f32 %v115, %v220
    %v317 = vmul.f32 %v116, %v192
    %v318 = vmul.f32 %v117, %v196
    %v319 = vmul.f32 %v118, %v200
    %v320 = vmul.f32 %v119, %v204
    %v321 = vmul.f32 %v120, %v208
    %v322 = vmul.f32 %v121, %v212
    %v323 = vmul.f32 %v122, %v216
    %v324 = vmul.f32 %v123, %v220
    %v325 = vmul.f32 %v124, %v192
    %v326 = vmul.f32 %v125, %v196
    %v327 = vmul.f32 %v126, %v200
    %v328 = vmul.f32 %v127, %v204
    %v329 = vmul.f32 %v128, %v208
    %v330 = vmul.f32 %v129, %v212
    %v331 = vmul.f32 %v130, %v216
    %v332 = vmul.f32 %v131, %v220
    %v333 = vmul.f32 %v132, %v192
    %v334 = vmul.f32 %v133, %v196
    %v335 = vmul.f32 %v134, %v200
    %v336 = vmul.f32 %v135, %v204
    %v337 = vmul.f32 %v136, %v208
    %v338 = vmul.f32 %v137, %v212
    %v339 = vmul.f32 %v138, %v216
    %v340 = vmul.f32 %v139, %v220
    %v341 = vmul.f32 %v140, %v192
    %v342 = vmul.f32 %v141, %v196
    %v343 = vmul.f32 %v142, %v200
    %v344 = vmul.f32 %v143, %v204
    %v345 = vmul.f32 %v144, %v208
    %v346 = vmul.f32 %v145, %v212
    %v347 = vmul.f32 %v146, %v216
    %v348 = vmul.f32 %v147, %v220
    %v349 = vmul.f32 %v148, %v192
    %v350 = vmul.f32 %v149, %v196
    %v351 = vmul.f32 %v150, %v200
    %v352 = vmul.f32 %v151, %v204
    %v353 = vmul.f32 %v152, %v208
    %v354 = vmul.f32 %v153, %v212
    %v355 = vmul.f32 %v154, %v216
    %v356 = vmul.f32 %v155, %v220
    %v357 = vmul.f32 %v156, %v192
    %v358 = vmul.f32 %v157, %v196
    %v359 = vmul.f32 %v158, %v200
    %v360 = vmul.f32 %v159, %v204
    %v361 = vmul.f32 %v160, %v208
    %v362 = vmul.f32 %v161, %v212
    %v363 = vmul.f32 %v162, %v216
    %v364 = vmul.f32 %v163, %v220
    %v365 = vmul.f32 %v164, %v192
    %v366 = vmul.f32 %v165, %v196
    %v367 = vmul.f32 %v166, %v200
    %v368 = vmul.f32 %v167, %v204
    %v369 = vmul.f32 %v168, %v208
    %v370 = vmul.f32 %v169, %v212
    %v371 = vmul.f32 %v170, %v216
    %v372 = vmul.f32 %v171, %v220
    %v373 = vmul.f32 %v172, %v192
    %v374 = vmul.f32 %v173, %v196
    %v375 = vmul.f32 %v174, %v200
    %v376 = vmul.f32 %v175, %v204
    %v377 = vmul.f32 %v176, %v208
    %v378 = vmul.f32 %v177, %v212
    %v379 = vmul.f32 %v178, %v216
    %v380 = vmul.f32 %v179, %v220
    %v381 = vmul.f32 %v180, %v192
    %v382 = vmul.f32 %v181, %v196
    %v383 = vmul.f32 %v182, %v200
    %v384 = vmul.f32 %v183, %v204
    %v385 = vmul.f32 %v184, %v208
    %v386 = vmul.f32 %v185, %v212
    %v387 = vmul.f32 %v186, %v216
    %v388 = vmul.f32 %v187, %v220
    %v389 = vld [vmem:[%s0] sm:$0xff]
    %v390 = vld [vmem:[%s0 + $0x8] sm:$0xff]
    %v391 = vld [vmem:[%s0 + $0x10] sm:$0xff]
    %v392 = vld [vmem:[%s0 + $0x18] sm:$0xff]
    %v393 = vld [vmem:[%s0 + $0x20] sm:$0xff]
    %v394 = vld [vmem:[%s0 + $0x28] sm:$0xff]
    %v395 = vld [vmem:[%s0 + $0x30] sm:$0xff]
    %v396 = vld [vmem:[%s0 + $0x38] sm:$0xff]
    %v397 = vld [vmem:[%s0 + $0x40] sm:$0xff]
    %v398 = vld [vmem:[%s0 + $0x48] sm:$0xff]
    %v399 = vld [vmem:[%s0 + $0x50] sm:$0xff]
    %v400 = vld [vmem:[%s0 + $0x58] sm:$0xff]
    %v401 = vld [vmem:[%s0 + $0x60] sm:$0xff]
    %v402 = vld [vmem:[%s0 + $0x68] sm:$0xff]
    %v403 = vld [vmem:[%s0 + $0x70] sm:$0xff]
    %v404 = vld [vmem:[%s0 + $0x78] sm:$0xff]
    %v405 = vld [vmem:[%s0 + $0x80] sm:$0xff]
    %v406 = vld [vmem:[%s0 + $0x88] sm:$0xff]
    %v407 = vld [vmem:[%s0 + $0x90] sm:$0xff]
    %v408 = vld [vmem:[%s0 + $0x98] sm:$0xff]
    %v409 = vld [vmem:[%s0 + $0xa0] sm:$0xff]
    %v410 = vld [vmem:[%s0 + $0xa8] sm:$0xff]
    %v411 = vld [vmem:[%s0 + $0xb0] sm:$0xff]
    %v412 = vld [vmem:[%s0 + $0xb8] sm:$0xff]
    %v413 = vld [vmem:[%s0 + $0xc0] sm:$0xff]
    %v414 = vld [vmem:[%s0 + $0xc8] sm:$0xff]
    %v415 = vld [vmem:[%s0 + $0xd0] sm:$0xff]
    %v416 = vld [vmem:[%s0 + $0xd8] sm:$0xff]
    %v417 = vld [vmem:[%s0 + $0xe0] sm:$0xff]
    %v418 = vld [vmem:[%s0 + $0xe8] sm:$0xff]
    %v419 = vld [vmem:[%s0 + $0xf0] sm:$0xff]
    %v420 = vld [vmem:[%s0 + $0xf8] sm:$0xff]
    %v421 = vld [vmem:[%s0 + $0x100] sm:$0xff]
    %v422 = vld [vmem:[%s0 + $0x108] sm:$0xff]
    %v423 = vld [vmem:[%s0 + $0x110] sm:$0xff]
    %v424 = vld [vmem:[%s0 + $0x118] sm:$0xff]
    %v425 = vld [vmem:[%s0 + $0x120] sm:$0xff]
    %v426 = vld [vmem:[%s0 + $0x128] sm:$0xff]
    %v427 = vld [vmem:[%s0 + $0x130] sm:$0xff]
    %v428 = vld [vmem:[%s0 + $0x138] sm:$0xff]
    %v429 = vld [vmem:[%s0 + $0x140] sm:$0xff]
    %v430 = vld [vmem:[%s0 + $0x148] sm:$0xff]
    %v431 = vld [vmem:[%s0 + $0x150] sm:$0xff]
    %v432 = vld [vmem:[%s0 + $0x158] sm:$0xff]
    %v433 = vld [vmem:[%s0 + $0x160] sm:$0xff]
    %v434 = vld [vmem:[%s0 + $0x168] sm:$0xff]
    %v435 = vld [vmem:[%s0 + $0x170] sm:$0xff]
    %v436 = vld [vmem:[%s0 + $0x178] sm:$0xff]
    %v437 = vld [vmem:[%s0 + $0x180] sm:$0xff]
    %v438 = vld [vmem:[%s0 + $0x188] sm:$0xff]
    %v439 = vld [vmem:[%s0 + $0x190] sm:$0xff]
    %v440 = vld [vmem:[%s0 + $0x198] sm:$0xff]
    %v441 = vld [vmem:[%s0 + $0x1a0] sm:$0xff]
    %v442 = vld [vmem:[%s0 + $0x1a8] sm:$0xff]
    %v443 = vld [vmem:[%s0 + $0x1b0] sm:$0xff]
    %v444 = vld [vmem:[%s0 + $0x1b8] sm:$0xff]
    %v445 = vld [vmem:[%s0 + $0x1c0] sm:$0xff]
    %v446 = vld [vmem:[%s0 + $0x1c8] sm:$0xff]
    %v447 = vld [vmem:[%s0 + $0x1d0] sm:$0xff]
    %v448 = vld [vmem:[%s0 + $0x1d8] sm:$0xff]
    %v449 = vld [vmem:[%s0 + $0x1e0] sm:$0xff]
    %v450 = vld [vmem:[%s0 + $0x1e8] sm:$0xff]
    %v451 = vld [vmem:[%s0 + $0x1f0] sm:$0xff]
    %v452 = vld [vmem:[%s0 + $0x1f8] sm:$0xff]
    %v453 = vld [vmem:[%s0 + $0x200] sm:$0xff]
    %v454 = vld [vmem:[%s0 + $0x208] sm:$0xff]
    %v455 = vld [vmem:[%s0 + $0x210] sm:$0xff]
    %v456 = vld [vmem:[%s0 + $0x218] sm:$0xff]
    %v457 = vld [vmem:[%s0 + $0x220] sm:$0xff]
    %v458 = vld [vmem:[%s0 + $0x228] sm:$0xff]
    %v459 = vld [vmem:[%s0 + $0x230] sm:$0xff]
    %v460 = vld [vmem:[%s0 + $0x238] sm:$0xff]
    %v461 = vld [vmem:[%s0 + $0x240] sm:$0xff]
    %v462 = vld [vmem:[%s0 + $0x248] sm:$0xff]
    %v463 = vld [vmem:[%s0 + $0x250] sm:$0xff]
    %v464 = vld [vmem:[%s0 + $0x258] sm:$0xff]
    %v465 = vld [vmem:[%s0 + $0x260] sm:$0xff]
    %v466 = vld [vmem:[%s0 + $0x268] sm:$0xff]
    %v467 = vld [vmem:[%s0 + $0x270] sm:$0xff]
    %v468 = vld [vmem:[%s0 + $0x278] sm:$0xff]
    %v469 = vld [vmem:[%s0 + $0x280] sm:$0xff]
    %v470 = vld [vmem:[%s0 + $0x288] sm:$0xff]
    %v471 = vld [vmem:[%s0 + $0x290] sm:$0xff]
    %v472 = vld [vmem:[%s0 + $0x298] sm:$0xff]
    %v473 = vld [vmem:[%s0 + $0x2a0] sm:$0xff]
    %v474 = vld [vmem:[%s0 + $0x2a8] sm:$0xff]
    %v475 = vld [vmem:[%s0 + $0x2b0] sm:$0xff]
    %v476 = vld [vmem:[%s0 + $0x2b8] sm:$0xff]
    %v477 = vld [vmem:[%s0 + $0x2c0] sm:$0xff]
    %v478 = vld [vmem:[%s0 + $0x2c8] sm:$0xff]
    %v479 = vld [vmem:[%s0 + $0x2d0] sm:$0xff]
    %v480 = vld [vmem:[%s0 + $0x2d8] sm:$0xff]
    %v481 = vld [vmem:[%s0 + $0x2e0] sm:$0xff]
    %v482 = vld [vmem:[%s0 + $0x2e8] sm:$0xff]
    %v483 = vld [vmem:[%s0 + $0x2f0] sm:$0xff]
    %v484 = vld [vmem:[%s0 + $0x2f8] sm:$0xff]
    %v485 = vld [vmem:[%s0 + $0x300] sm:$0xff]
    %v486 = vld [vmem:[%s0 + $0x308] sm:$0xff]
    %v487 = vld [vmem:[%s0 + $0x310] sm:$0xff]
    %v488 = vld [vmem:[%s0 + $0x318] sm:$0xff]
    %v489 = vld [vmem:[%s0 + $0x320] sm:$0xff]
    %v490 = vld [vmem:[%s0 + $0x328] sm:$0xff]
    %v491 = vld [vmem:[%s0 + $0x330] sm:$0xff]
    %v492 = vld [vmem:[%s0 + $0x338] sm:$0xff]
    %v493 = vld [vmem:[%s0 + $0x340] sm:$0xff]
    %v494 = vld [vmem:[%s0 + $0x348] sm:$0xff]
    %v495 = vld [vmem:[%s0 + $0x350] sm:$0xff]
    %v496 = vld [vmem:[%s0 + $0x358] sm:$0xff]
    %v497 = vld [vmem:[%s0 + $0x360] sm:$0xff]
    %v498 = vld [vmem:[%s0 + $0x368] sm:$0xff]
    %v499 = vld [vmem:[%s0 + $0x370] sm:$0xff]
    %v500 = vld [vmem:[%s0 + $0x378] sm:$0xff]
    %v501 = vld [vmem:[%s0 + $0x380] sm:$0xff]
    %v502 = vld [vmem:[%s0 + $0x388] sm:$0xff]
    %v503 = vld [vmem:[%s0 + $0x390] sm:$0xff]
    %v504 = vld [vmem:[%s0 + $0x398] sm:$0xff]
    %v505 = vld [vmem:[%s0 + $0x3a0] sm:$0xff]
    %v506 = vld [vmem:[%s0 + $0x3a8] sm:$0xff]
    %v507 = vld [vmem:[%s0 + $0x3b0] sm:$0xff]
    %v508 = vld [vmem:[%s0 + $0x3b8] sm:$0xff]
    %v509 = vld [vmem:[%s0 + $0x3c0] sm:$0xff]
    %v510 = vld [vmem:[%s0 + $0x3c8] sm:$0xff]
    %v511 = vld [vmem:[%s0 + $0x3d0] sm:$0xff]
    %v512 = vld [vmem:[%s0 + $0x3d8] sm:$0xff]
    %v513 = vld [vmem:[%s0 + $0x3e0] sm:$0xff]
    %v514 = vld [vmem:[%s0 + $0x3e8] sm:$0xff]
    %v515 = vld [vmem:[%s0 + $0x3f0] sm:$0xff]
    %v516 = vld [vmem:[%s0 + $0x3f8] sm:$0xff]
    %v517 = vld [vmem:[%s0 + $0x400] sm:$0xff]
    %v518 = vld [vmem:[%s0 + $0x408] sm:$0xff]
    %v519 = vld [vmem:[%s0 + $0x410] sm:$0xff]
    %v520 = vld [vmem:[%s0 + $0x418] sm:$0xff]
    %v521 = vld [vmem:[%s0 + $0x420] sm:$0xff]
    %v522 = vld [vmem:[%s0 + $0x428] sm:$0xff]
    %v523 = vld [vmem:[%s0 + $0x430] sm:$0xff]
    %v524 = vld [vmem:[%s0 + $0x438] sm:$0xff]
    %v525 = vld [vmem:[%s0 + $0x440] sm:$0xff]
    %v526 = vld [vmem:[%s0 + $0x448] sm:$0xff]
    %v527 = vld [vmem:[%s0 + $0x450] sm:$0xff]
    %v528 = vld [vmem:[%s0 + $0x458] sm:$0xff]
    %v529 = vld [vmem:[%s0 + $0x460] sm:$0xff]
    %v530 = vld [vmem:[%s0 + $0x468] sm:$0xff]
    %v531 = vld [vmem:[%s0 + $0x470] sm:$0xff]
    %v532 = vld [vmem:[%s0 + $0x478] sm:$0xff]
    %v533 = vld [vmem:[%s0 + $0x480] sm:$0xff]
    %v534 = vld [vmem:[%s0 + $0x488] sm:$0xff]
    %v535 = vld [vmem:[%s0 + $0x490] sm:$0xff]
    %v536 = vld [vmem:[%s0 + $0x498] sm:$0xff]
    %v537 = vld [vmem:[%s0 + $0x4a0] sm:$0xff]
    %v538 = vld [vmem:[%s0 + $0x4a8] sm:$0xff]
    %v539 = vld [vmem:[%s0 + $0x4b0] sm:$0xff]
    %v540 = vld [vmem:[%s0 + $0x4b8] sm:$0xff]
    %v541 = vld [vmem:[%s0 + $0x4c0] sm:$0xff]
    %v542 = vld [vmem:[%s0 + $0x4c8] sm:$0xff]
    %v543 = vld [vmem:[%s0 + $0x4d0] sm:$0xff]
    %v544 = vld [vmem:[%s0 + $0x4d8] sm:$0xff]
    %v545 = vld [vmem:[%s0 + $0x4e0] sm:$0xff]
    %v546 = vld [vmem:[%s0 + $0x4e8] sm:$0xff]
    %v547 = vld [vmem:[%s0 + $0x4f0] sm:$0xff]
    %v548 = vld [vmem:[%s0 + $0x4f8] sm:$0xff]
    %v549 = vld [vmem:[%s0 + $0x500] sm:$0xff]
    %v550 = vld [vmem:[%s0 + $0x508] sm:$0xff]
    %v551 = vld [vmem:[%s0 + $0x510] sm:$0xff]
    %v552 = vld [vmem:[%s0 + $0x518] sm:$0xff]
    %v553 = vld [vmem:[%s0 + $0x520] sm:$0xff]
    %v554 = vld [vmem:[%s0 + $0x528] sm:$0xff]
    %v555 = vld [vmem:[%s0 + $0x530] sm:$0xff]
    %v556 = vld [vmem:[%s0 + $0x538] sm:$0xff]
    %v557 = vld [vmem:[%s0 + $0x540] sm:$0xff]
    %v558 = vld [vmem:[%s0 + $0x548] sm:$0xff]
    %v559 = vld [vmem:[%s0 + $0x550] sm:$0xff]
    %v560 = vld [vmem:[%s0 + $0x558] sm:$0xff]
    %v561 = vld [vmem:[%s0 + $0x560] sm:$0xff]
    %v562 = vld [vmem:[%s0 + $0x568] sm:$0xff]
    %v563 = vld [vmem:[%s0 + $0x570] sm:$0xff]
    %v564 = vld [vmem:[%s0 + $0x578] sm:$0xff]
    %v565 = vld [vmem:[%s0 + $0x580] sm:$0xff]
    %v566 = vld [vmem:[%s0 + $0x588] sm:$0xff]
    %v567 = vld [vmem:[%s0 + $0x590] sm:$0xff]
    %v568 = vld [vmem:[%s0 + $0x598] sm:$0xff]
    %v569 = vld [vmem:[%s0 + $0x5a0] sm:$0xff]
    %v570 = vld [vmem:[%s0 + $0x5a8] sm:$0xff]
    %v571 = vld [vmem:[%s0 + $0x5b0] sm:$0xff]
    %v572 = vld [vmem:[%s0 + $0x5b8] sm:$0xff]
    %v573 = vld [vmem:[%s0 + $0x5c0] sm:$0xff]
    %v574 = vld [vmem:[%s0 + $0x5c8] sm:$0xff]
    %v575 = vld [vmem:[%s0 + $0x5d0] sm:$0xff]
    %v576 = vld [vmem:[%s0 + $0x5d8] sm:$0xff]
    %v577 = vld [vmem:[%s0 + $0x5e0] sm:$0xff]
    %v578 = vld [vmem:[%s0 + $0x5e8] sm:$0xff]
    %v579 = vld [vmem:[%s0 + $0x5f0] sm:$0xff]
    %v580 = vld [vmem:[%s0 + $0x5f8] sm:$0xff]
    %v581 = vld [vmem:[%s0 + $0x600] sm:$0xff]
    %v582 = vld [vmem:[%s0 + $0x608] sm:$0xff]
    %v583 = vld [vmem:[%s0 + $0x610] sm:$0xff]
    %v584 = vld [vmem:[%s0 + $0x618] sm:$0xff]
    %v585 = vld [vmem:[%s0 + $0x620] sm:$0xff]
    %v586 = vld [vmem:[%s0 + $0x628] sm:$0xff]
    %v587 = vld [vmem:[%s0 + $0x630] sm:$0xff]
    %v588 = vld [vmem:[%s0 + $0x638] sm:$0xff]
    %v589 = vld [vmem:[%s0 + $0x640] sm:$0xff]
    %v590 = vld [vmem:[%s0 + $0x648] sm:$0xff]
    %v591 = vld [vmem:[%s0 + $0x650] sm:$0xff]
    %v592 = vld [vmem:[%s0 + $0x658] sm:$0xff]
    %v593 = vld [vmem:[%s0 + $0x660] sm:$0xff]
    %v594 = vld [vmem:[%s0 + $0x668] sm:$0xff]
    %v595 = vld [vmem:[%s0 + $0x670] sm:$0xff]
    %v596 = vld [vmem:[%s0 + $0x678] sm:$0xff]
    %v597 = vld [vmem:[%s0 + $0x680] sm:$0xff]
    %v598 = vld [vmem:[%s0 + $0x688] sm:$0xff]
    %v599 = vld [vmem:[%s0 + $0x690] sm:$0xff]
    %v600 = vld [vmem:[%s0 + $0x698] sm:$0xff]
    %v601 = vld [vmem:[%s0 + $0x6a0] sm:$0xff]
    %v602 = vld [vmem:[%s0 + $0x6a8] sm:$0xff]
    %v603 = vld [vmem:[%s0 + $0x6b0] sm:$0xff]
    %v604 = vld [vmem:[%s0 + $0x6b8] sm:$0xff]
    %v605 = vld [vmem:[%s0 + $0x6c0] sm:$0xff]
    %v606 = vld [vmem:[%s0 + $0x6c8] sm:$0xff]
    %v607 = vld [vmem:[%s0 + $0x6d0] sm:$0xff]
    %v608 = vld [vmem:[%s0 + $0x6d8] sm:$0xff]
    %v609 = vld [vmem:[%s0 + $0x6e0] sm:$0xff]
    %v610 = vld [vmem:[%s0 + $0x6e8] sm:$0xff]
    %v611 = vld [vmem:[%s0 + $0x6f0] sm:$0xff]
    %v612 = vld [vmem:[%s0 + $0x6f8] sm:$0xff]
    %v613 = vld [vmem:[%s0 + $0x700] sm:$0xff]
    %v614 = vld [vmem:[%s0 + $0x708] sm:$0xff]
    %v615 = vld [vmem:[%s0 + $0x710] sm:$0xff]
    %v616 = vld [vmem:[%s0 + $0x718] sm:$0xff]
    %v617 = vld [vmem:[%s0 + $0x720] sm:$0xff]
    %v618 = vld [vmem:[%s0 + $0x728] sm:$0xff]
    %v619 = vld [vmem:[%s0 + $0x730] sm:$0xff]
    %v620 = vld [vmem:[%s0 + $0x738] sm:$0xff]
    %v621 = vld [vmem:[%s0 + $0x740] sm:$0xff]
    %v622 = vld [vmem:[%s0 + $0x748] sm:$0xff]
    %v623 = vld [vmem:[%s0 + $0x750] sm:$0xff]
    %v624 = vld [vmem:[%s0 + $0x758] sm:$0xff]
    %v625 = vld [vmem:[%s0 + $0x760] sm:$0xff]
    %v626 = vld [vmem:[%s0 + $0x768] sm:$0xff]
    %v627 = vld [vmem:[%s0 + $0x770] sm:$0xff]
    %v628 = vld [vmem:[%s0 + $0x778] sm:$0xff]
    %vm629 = vcmask 523264
    %v631 = vsel %vm629, %v236, 0
    %v634 = vsel %vm629, %v244, 0
    %v637 = vsel %vm629, %v252, 0
    %v640 = vsel %vm629, %v260, 0
    %v643 = vsel %vm629, %v268, 0
    %v646 = vsel %vm629, %v276, 0
    %v649 = vsel %vm629, %v284, 0
    %v652 = vsel %vm629, %v292, 0
    %v655 = vsel %vm629, %v300, 0
    %v658 = vsel %vm629, %v308, 0
    %v661 = vsel %vm629, %v316, 0
    %v664 = vsel %vm629, %v324, 0
    %v667 = vsel %vm629, %v332, 0
    %v670 = vsel %vm629, %v340, 0
    %v673 = vsel %vm629, %v348, 0
    %v676 = vsel %vm629, %v356, 0
    %v679 = vsel %vm629, %v364, 0
    %v682 = vsel %vm629, %v372, 0
    %v685 = vsel %vm629, %v380, 0
    %v688 = vsel %vm629, %v388, 0
    %690 = vmatprep.subr.mxu0 %v420
    %691 = vmatpush1.msra.mxu0 %v419
    %692 = vmatprep.subr.mxu0 %v418
    %693 = vmatpush1.msra.mxu0 %v417
    %694 = vmatprep.subr.mxu0 %v416
    %695 = vmatpush1.msra.mxu0 %v415
    %696 = vmatprep.subr.mxu0 %v414
    %697 = vmatpush1.msra.mxu0 %v413
    %698 = vmatprep.subr.mxu0 %v412
    %699 = vmatpush1.msra.mxu0 %v411
    %700 = vmatprep.subr.mxu0 %v410
    %701 = vmatpush1.msra.mxu0 %v409
    %702 = vmatprep.subr.mxu0 %v408
    %703 = vmatpush1.msra.mxu0 %v407
    %704 = vmatprep.subr.mxu0 %v406
    %705 = vmatpush1.msra.mxu0 %v405
    %706 = vmatprep.subr.mxu0 %v404
    %707 = vmatpush1.msra.mxu0 %v403
    %708 = vmatprep.subr.mxu0 %v402
    %709 = vmatpush1.msra.mxu0 %v401
    %710 = vmatprep.subr.mxu0 %v400
    %711 = vmatpush1.msra.mxu0 %v399
    %712 = vmatprep.subr.mxu0 %v398
    %713 = vmatpush1.msra.mxu0 %v397
    %714 = vmatprep.subr.mxu0 %v396
    %715 = vmatpush1.msra.mxu0 %v395
    %716 = vmatprep.subr.mxu0 %v394
    %717 = vmatpush1.msra.mxu0 %v393
    %718 = vmatprep.subr.mxu0 %v392
    %719 = vmatpush1.msra.mxu0 %v391
    %720 = vmatprep.subr.mxu0 %v390
    %721 = vmatpush1.msra.mxu0 %v389
    %722 = vmatprep.subr.mxu0 %v452
    %723 = vmatpush2.msra.mxu0 %v451
    %724 = vmatprep.subr.mxu0 %v450
    %725 = vmatpush2.msra.mxu0 %v449
    %726 = vmatprep.subr.mxu0 %v448
    %727 = vmatpush2.msra.mxu0 %v447
    %728 = vmatprep.subr.mxu0 %v446
    %729 = vmatpush2.msra.mxu0 %v445
    %730 = vmatprep.subr.mxu0 %v444
    %731 = vmatpush2.msra.mxu0 %v443
    %732 = vmatprep.subr.mxu0 %v442
    %733 = vmatpush2.msra.mxu0 %v441
    %734 = vmatprep.subr.mxu0 %v440
    %735 = vmatpush2.msra.mxu0 %v439
    %736 = vmatprep.subr.mxu0 %v438
    %737 = vmatpush2.msra.mxu0 %v437
    %738 = vmatprep.subr.mxu0 %v436
    %739 = vmatpush2.msra.mxu0 %v435
    %740 = vmatprep.subr.mxu0 %v434
    %741 = vmatpush2.msra.mxu0 %v433
    %742 = vmatprep.subr.mxu0 %v432
    %743 = vmatpush2.msra.mxu0 %v431
    %744 = vmatprep.subr.mxu0 %v430
    %745 = vmatpush2.msra.mxu0 %v429
    %746 = vmatprep.subr.mxu0 %v428
    %747 = vmatpush2.msra.mxu0 %v427
    %748 = vmatprep.subr.mxu0 %v426
    %749 = vmatpush2.msra.mxu0 %v425
    %750 = vmatprep.subr.mxu0 %v424
    %751 = vmatpush2.msra.mxu0 %v423
    %752 = vmatprep.subr.mxu0 %v422
    %753 = vmatpush2.msra.mxu0 %v421
    %754 = vmatprep.mubr.f32.mxu0 %v230
    %755 = vmatmul.mubr.f32.gmra.mxu0 %v229
    %v756 = vpop.f32.mrf.mxu0
    %v757 = vadd.f32 0.0, %v756
    %v758 = vpop.f32.mrf.mxu0
    %v759 = vadd.f32 0.0, %v758
    %760 = vmatprep.mubr.f32.mxu0 %v238
    %761 = vmatmul.mubr.f32.gmra.mxu0 %v237
    %v762 = vpop.f32.mrf.mxu0
    %v763 = vadd.f32 0.0, %v762
    %v764 = vpop.f32.mrf.mxu0
    %v765 = vadd.f32 0.0, %v764
    %766 = vmatprep.mubr.f32.mxu0 %v246
    %767 = vmatmul.mubr.f32.gmra.mxu0 %v245
    %v768 = vpop.f32.mrf.mxu0
    %v769 = vadd.f32 0.0, %v768
    %v770 = vpop.f32.mrf.mxu0
    %v771 = vadd.f32 0.0, %v770
    %772 = vmatprep.mubr.f32.mxu0 %v254
    %773 = vmatmul.mubr.f32.gmra.mxu0 %v253
    %v774 = vpop.f32.mrf.mxu0
    %v775 = vadd.f32 0.0, %v774
    %v776 = vpop.f32.mrf.mxu0
    %v777 = vadd.f32 0.0, %v776
    %778 = vmatprep.mubr.f32.mxu0 %v262
    %779 = vmatmul.mubr.f32.gmra.mxu0 %v261
    %v780 = vpop.f32.mrf.mxu0
    %v781 = vadd.f32 0.0, %v780
    %v782 = vpop.f32.mrf.mxu0
    %v783 = vadd.f32 0.0, %v782
    %784 = vmatprep.mubr.f32.mxu0 %v270
    %785 = vmatmul.mubr.f32.gmra.mxu0 %v269
    %v786 = vpop.f32.mrf.mxu0
    %v787 = vadd.f32 0.0, %v786
    %v788 = vpop.f32.mrf.mxu0
    %v789 = vadd.f32 0.0, %v788
    %790 = vmatprep.mubr.f32.mxu0 %v278
    %791 = vmatmul.mubr.f32.gmra.mxu0 %v277
    %v792 = vpop.f32.mrf.mxu0
    %v793 = vadd.f32 0.0, %v792
    %v794 = vpop.f32.mrf.mxu0
    %v795 = vadd.f32 0.0, %v794
    %796 = vmatprep.mubr.f32.mxu0 %v286
    %797 = vmatmul.mubr.f32.gmra.mxu0 %v285
    %v798 = vpop.f32.mrf.mxu0
    %v799 = vadd.f32 0.0, %v798
    %v800 = vpop.f32.mrf.mxu0
    %v801 = vadd.f32 0.0, %v800
    %802 = vmatprep.mubr.f32.mxu0 %v294
    %803 = vmatmul.mubr.f32.gmra.mxu0 %v293
    %v804 = vpop.f32.mrf.mxu0
    %v805 = vadd.f32 0.0, %v804
    %v806 = vpop.f32.mrf.mxu0
    %v807 = vadd.f32 0.0, %v806
    %808 = vmatprep.mubr.f32.mxu0 %v302
    %809 = vmatmul.mubr.f32.gmra.mxu0 %v301
    %v810 = vpop.f32.mrf.mxu0
    %v811 = vadd.f32 0.0, %v810
    %v812 = vpop.f32.mrf.mxu0
    %v813 = vadd.f32 0.0, %v812
    %814 = vmatprep.mubr.f32.mxu0 %v310
    %815 = vmatmul.mubr.f32.gmra.mxu0 %v309
    %v816 = vpop.f32.mrf.mxu0
    %v817 = vadd.f32 0.0, %v816
    %v818 = vpop.f32.mrf.mxu0
    %v819 = vadd.f32 0.0, %v818
    %820 = vmatprep.mubr.f32.mxu0 %v318
    %821 = vmatmul.mubr.f32.gmra.mxu0 %v317
    %v822 = vpop.f32.mrf.mxu0
    %v823 = vadd.f32 0.0, %v822
    %v824 = vpop.f32.mrf.mxu0
    %v825 = vadd.f32 0.0, %v824
    %826 = vmatprep.mubr.f32.mxu0 %v326
    %827 = vmatmul.mubr.f32.gmra.mxu0 %v325
    %v828 = vpop.f32.mrf.mxu0
    %v829 = vadd.f32 0.0, %v828
    %v830 = vpop.f32.mrf.mxu0
    %v831 = vadd.f32 0.0, %v830
    %832 = vmatprep.mubr.f32.mxu0 %v334
    %833 = vmatmul.mubr.f32.gmra.mxu0 %v333
    %v834 = vpop.f32.mrf.mxu0
    %v835 = vadd.f32 0.0, %v834
    %v836 = vpop.f32.mrf.mxu0
    %v837 = vadd.f32 0.0, %v836
    %838 = vmatprep.mubr.f32.mxu0 %v342
    %839 = vmatmul.mubr.f32.gmra.mxu0 %v341
    %v840 = vpop.f32.mrf.mxu0
    %v841 = vadd.f32 0.0, %v840
    %v842 = vpop.f32.mrf.mxu0
    %v843 = vadd.f32 0.0, %v842
    %844 = vmatprep.mubr.f32.mxu0 %v350
    %845 = vmatmul.mubr.f32.gmra.mxu0 %v349
    %v846 = vpop.f32.mrf.mxu0
    %v847 = vadd.f32 0.0, %v846
    %v848 = vpop.f32.mrf.mxu0
    %v849 = vadd.f32 0.0, %v848
    %850 = vmatprep.mubr.f32.mxu0 %v358
    %851 = vmatmul.mubr.f32.gmra.mxu0 %v357
    %v852 = vpop.f32.mrf.mxu0
    %v853 = vadd.f32 0.0, %v852
    %v854 = vpop.f32.mrf.mxu0
    %v855 = vadd.f32 0.0, %v854
    %856 = vmatprep.mubr.f32.mxu0 %v366
    %857 = vmatmul.mubr.f32.gmra.mxu0 %v365
    %v858 = vpop.f32.mrf.mxu0
    %v859 = vadd.f32 0.0, %v858
    %v860 = vpop.f32.mrf.mxu0
    %v861 = vadd.f32 0.0, %v860
    %862 = vmatprep.mubr.f32.mxu0 %v374
    %863 = vmatmul.mubr.f32.gmra.mxu0 %v373
    %v864 = vpop.f32.mrf.mxu0
    %v865 = vadd.f32 0.0, %v864
    %v866 = vpop.f32.mrf.mxu0
    %v867 = vadd.f32 0.0, %v866
    %868 = vmatprep.mubr.f32.mxu0 %v382
    %869 = vmatmul.mubr.f32.gmra.mxu0 %v381
    %v870 = vpop.f32.mrf.mxu0
    %v871 = vadd.f32 0.0, %v870
    %v872 = vpop.f32.mrf.mxu0
    %v873 = vadd.f32 0.0, %v872
    %874 = vdwg.mxu0
    %875 = vmatprep.subr.mxu0 %v484
    %876 = vmatpush1.msra.mxu0 %v483
    %877 = vmatprep.subr.mxu0 %v482
    %878 = vmatpush1.msra.mxu0 %v481
    %879 = vmatprep.subr.mxu0 %v480
    %880 = vmatpush1.msra.mxu0 %v479
    %881 = vmatprep.subr.mxu0 %v478
    %882 = vmatpush1.msra.mxu0 %v477
    %883 = vmatprep.subr.mxu0 %v476
    %884 = vmatpush1.msra.mxu0 %v475
    %885 = vmatprep.subr.mxu0 %v474
    %886 = vmatpush1.msra.mxu0 %v473
    %887 = vmatprep.subr.mxu0 %v472
    %888 = vmatpush1.msra.mxu0 %v471
    %889 = vmatprep.subr.mxu0 %v470
    %890 = vmatpush1.msra.mxu0 %v469
    %891 = vmatprep.subr.mxu0 %v468
    %892 = vmatpush1.msra.mxu0 %v467
    %893 = vmatprep.subr.mxu0 %v466
    %894 = vmatpush1.msra.mxu0 %v465
    %895 = vmatprep.subr.mxu0 %v464
    %896 = vmatpush1.msra.mxu0 %v463
    %897 = vmatprep.subr.mxu0 %v462
    %898 = vmatpush1.msra.mxu0 %v461
    %899 = vmatprep.subr.mxu0 %v460
    %900 = vmatpush1.msra.mxu0 %v459
    %901 = vmatprep.subr.mxu0 %v458
    %902 = vmatpush1.msra.mxu0 %v457
    %903 = vmatprep.subr.mxu0 %v456
    %904 = vmatpush1.msra.mxu0 %v455
    %905 = vmatprep.subr.mxu0 %v454
    %906 = vmatpush1.msra.mxu0 %v453
    %907 = vmatprep.subr.mxu0 %v516
    %908 = vmatpush2.msra.mxu0 %v515
    %909 = vmatprep.subr.mxu0 %v514
    %910 = vmatpush2.msra.mxu0 %v513
    %911 = vmatprep.subr.mxu0 %v512
    %912 = vmatpush2.msra.mxu0 %v511
    %913 = vmatprep.subr.mxu0 %v510
    %914 = vmatpush2.msra.mxu0 %v509
    %915 = vmatprep.subr.mxu0 %v508
    %916 = vmatpush2.msra.mxu0 %v507
    %917 = vmatprep.subr.mxu0 %v506
    %918 = vmatpush2.msra.mxu0 %v505
    %919 = vmatprep.subr.mxu0 %v504
    %920 = vmatpush2.msra.mxu0 %v503
    %921 = vmatprep.subr.mxu0 %v502
    %922 = vmatpush2.msra.mxu0 %v501
    %923 = vmatprep.subr.mxu0 %v500
    %924 = vmatpush2.msra.mxu0 %v499
    %925 = vmatprep.subr.mxu0 %v498
    %926 = vmatpush2.msra.mxu0 %v497
    %927 = vmatprep.subr.mxu0 %v496
    %928 = vmatpush2.msra.mxu0 %v495
    %929 = vmatprep.subr.mxu0 %v494
    %930 = vmatpush2.msra.mxu0 %v493
    %931 = vmatprep.subr.mxu0 %v492
    %932 = vmatpush2.msra.mxu0 %v491
    %933 = vmatprep.subr.mxu0 %v490
    %934 = vmatpush2.msra.mxu0 %v489
    %935 = vmatprep.subr.mxu0 %v488
    %936 = vmatpush2.msra.mxu0 %v487
    %937 = vmatprep.subr.mxu0 %v486
    %938 = vmatpush2.msra.mxu0 %v485
    %939 = vmatprep.mubr.f32.mxu0 %v232
    %940 = vmatmul.mubr.f32.gmra.mxu0 %v231
    %v941 = vpop.f32.mrf.mxu0
    %v942 = vadd.f32 %v757, %v941
    %v943 = vpop.f32.mrf.mxu0
    %v944 = vadd.f32 %v759, %v943
    %945 = vmatprep.mubr.f32.mxu0 %v240
    %946 = vmatmul.mubr.f32.gmra.mxu0 %v239
    %v947 = vpop.f32.mrf.mxu0
    %v948 = vadd.f32 %v763, %v947
    %v949 = vpop.f32.mrf.mxu0
    %v950 = vadd.f32 %v765, %v949
    %951 = vmatprep.mubr.f32.mxu0 %v248
    %952 = vmatmul.mubr.f32.gmra.mxu0 %v247
    %v953 = vpop.f32.mrf.mxu0
    %v954 = vadd.f32 %v769, %v953
    %v955 = vpop.f32.mrf.mxu0
    %v956 = vadd.f32 %v771, %v955
    %957 = vmatprep.mubr.f32.mxu0 %v256
    %958 = vmatmul.mubr.f32.gmra.mxu0 %v255
    %v959 = vpop.f32.mrf.mxu0
    %v960 = vadd.f32 %v775, %v959
    %v961 = vpop.f32.mrf.mxu0
    %v962 = vadd.f32 %v777, %v961
    %963 = vmatprep.mubr.f32.mxu0 %v264
    %964 = vmatmul.mubr.f32.gmra.mxu0 %v263
    %v965 = vpop.f32.mrf.mxu0
    %v966 = vadd.f32 %v781, %v965
    %v967 = vpop.f32.mrf.mxu0
    %v968 = vadd.f32 %v783, %v967
    %969 = vmatprep.mubr.f32.mxu0 %v272
    %970 = vmatmul.mubr.f32.gmra.mxu0 %v271
    %v971 = vpop.f32.mrf.mxu0
    %v972 = vadd.f32 %v787, %v971
    %v973 = vpop.f32.mrf.mxu0
    %v974 = vadd.f32 %v789, %v973
    %975 = vmatprep.mubr.f32.mxu0 %v280
    %976 = vmatmul.mubr.f32.gmra.mxu0 %v279
    %v977 = vpop.f32.mrf.mxu0
    %v978 = vadd.f32 %v793, %v977
    %v979 = vpop.f32.mrf.mxu0
    %v980 = vadd.f32 %v795, %v979
    %981 = vmatprep.mubr.f32.mxu0 %v288
    %982 = vmatmul.mubr.f32.gmra.mxu0 %v287
    %v983 = vpop.f32.mrf.mxu0
    %v984 = vadd.f32 %v799, %v983
    %v985 = vpop.f32.mrf.mxu0
    %v986 = vadd.f32 %v801, %v985
    %987 = vmatprep.mubr.f32.mxu0 %v296
    %988 = vmatmul.mubr.f32.gmra.mxu0 %v295
    %v989 = vpop.f32.mrf.mxu0
    %v990 = vadd.f32 %v805, %v989
    %v991 = vpop.f32.mrf.mxu0
    %v992 = vadd.f32 %v807, %v991
    %993 = vmatprep.mubr.f32.mxu0 %v304
    %994 = vmatmul.mubr.f32.gmra.mxu0 %v303
    %v995 = vpop.f32.mrf.mxu0
    %v996 = vadd.f32 %v811, %v995
    %v997 = vpop.f32.mrf.mxu0
    %v998 = vadd.f32 %v813, %v997
    %999 = vmatprep.mubr.f32.mxu0 %v312
    %1000 = vmatmul.mubr.f32.gmra.mxu0 %v311
    %v1001 = vpop.f32.mrf.mxu0
    %v1002 = vadd.f32 %v817, %v1001
    %v1003 = vpop.f32.mrf.mxu0
    %v1004 = vadd.f32 %v819, %v1003
    %1005 = vmatprep.mubr.f32.mxu0 %v320
    %1006 = vmatmul.mubr.f32.gmra.mxu0 %v319
    %v1007 = vpop.f32.mrf.mxu0
    %v1008 = vadd.f32 %v823, %v1007
    %v1009 = vpop.f32.mrf.mxu0
    %v1010 = vadd.f32 %v825, %v1009
    %1011 = vmatprep.mubr.f32.mxu0 %v328
    %1012 = vmatmul.mubr.f32.gmra.mxu0 %v327
    %v1013 = vpop.f32.mrf.mxu0
    %v1014 = vadd.f32 %v829, %v1013
    %v1015 = vpop.f32.mrf.mxu0
    %v1016 = vadd.f32 %v831, %v1015
    %1017 = vmatprep.mubr.f32.mxu0 %v336
    %1018 = vmatmul.mubr.f32.gmra.mxu0 %v335
    %v1019 = vpop.f32.mrf.mxu0
    %v1020 = vadd.f32 %v835, %v1019
    %v1021 = vpop.f32.mrf.mxu0
    %v1022 = vadd.f32 %v837, %v1021
    %1023 = vmatprep.mubr.f32.mxu0 %v344
    %1024 = vmatmul.mubr.f32.gmra.mxu0 %v343
    %v1025 = vpop.f32.mrf.mxu0
    %v1026 = vadd.f32 %v841, %v1025
    %v1027 = vpop.f32.mrf.mxu0
    %v1028 = vadd.f32 %v843, %v1027
    %1029 = vmatprep.mubr.f32.mxu0 %v352
    %1030 = vmatmul.mubr.f32.gmra.mxu0 %v351
    %v1031 = vpop.f32.mrf.mxu0
    %v1032 = vadd.f32 %v847, %v1031
    %v1033 = vpop.f32.mrf.mxu0
    %v1034 = vadd.f32 %v849, %v1033
    %1035 = vmatprep.mubr.f32.mxu0 %v360
    %1036 = vmatmul.mubr.f32.gmra.mxu0 %v359
    %v1037 = vpop.f32.mrf.mxu0
    %v1038 = vadd.f32 %v853, %v1037
    %v1039 = vpop.f32.mrf.mxu0
    %v1040 = vadd.f32 %v855, %v1039
    %1041 = vmatprep.mubr.f32.mxu0 %v368
    %1042 = vmatmul.mubr.f32.gmra.mxu0 %v367
    %v1043 = vpop.f32.mrf.mxu0
    %v1044 = vadd.f32 %v859, %v1043
    %v1045 = vpop.f32.mrf.mxu0
    %v1046 = vadd.f32 %v861, %v1045
    %1047 = vmatprep.mubr.f32.mxu0 %v376
    %1048 = vmatmul.mubr.f32.gmra.mxu0 %v375
    %v1049 = vpop.f32.mrf.mxu0
    %v1050 = vadd.f32 %v865, %v1049
    %v1051 = vpop.f32.mrf.mxu0
    %v1052 = vadd.f32 %v867, %v1051
    %1053 = vmatprep.mubr.f32.mxu0 %v384
    %1054 = vmatmul.mubr.f32.gmra.mxu0 %v383
    %v1055 = vpop.f32.mrf.mxu0
    %v1056 = vadd.f32 %v871, %v1055
    %v1057 = vpop.f32.mrf.mxu0
    %v1058 = vadd.f32 %v873, %v1057
    %1059 = vdwg.mxu0
    %1060 = vmatprep.subr.mxu0 %v548
    %1061 = vmatpush1.msra.mxu0 %v547
    %1062 = vmatprep.subr.mxu0 %v546
    %1063 = vmatpush1.msra.mxu0 %v545
    %1064 = vmatprep.subr.mxu0 %v544
    %1065 = vmatpush1.msra.mxu0 %v543
    %1066 = vmatprep.subr.mxu0 %v542
    %1067 = vmatpush1.msra.mxu0 %v541
    %1068 = vmatprep.subr.mxu0 %v540
    %1069 = vmatpush1.msra.mxu0 %v539
    %1070 = vmatprep.subr.mxu0 %v538
    %1071 = vmatpush1.msra.mxu0 %v537
    %1072 = vmatprep.subr.mxu0 %v536
    %1073 = vmatpush1.msra.mxu0 %v535
    %1074 = vmatprep.subr.mxu0 %v534
    %1075 = vmatpush1.msra.mxu0 %v533
    %1076 = vmatprep.subr.mxu0 %v532
    %1077 = vmatpush1.msra.mxu0 %v531
    %1078 = vmatprep.subr.mxu0 %v530
    %1079 = vmatpush1.msra.mxu0 %v529
    %1080 = vmatprep.subr.mxu0 %v528
    %1081 = vmatpush1.msra.mxu0 %v527
    %1082 = vmatprep.subr.mxu0 %v526
    %1083 = vmatpush1.msra.mxu0 %v525
    %1084 = vmatprep.subr.mxu0 %v524
    %1085 = vmatpush1.msra.mxu0 %v523
    %1086 = vmatprep.subr.mxu0 %v522
    %1087 = vmatpush1.msra.mxu0 %v521
    %1088 = vmatprep.subr.mxu0 %v520
    %1089 = vmatpush1.msra.mxu0 %v519
    %1090 = vmatprep.subr.mxu0 %v518
    %1091 = vmatpush1.msra.mxu0 %v517
    %1092 = vmatprep.subr.mxu0 %v580
    %1093 = vmatpush2.msra.mxu0 %v579
    %1094 = vmatprep.subr.mxu0 %v578
    %1095 = vmatpush2.msra.mxu0 %v577
    %1096 = vmatprep.subr.mxu0 %v576
    %1097 = vmatpush2.msra.mxu0 %v575
    %1098 = vmatprep.subr.mxu0 %v574
    %1099 = vmatpush2.msra.mxu0 %v573
    %1100 = vmatprep.subr.mxu0 %v572
    %1101 = vmatpush2.msra.mxu0 %v571
    %1102 = vmatprep.subr.mxu0 %v570
    %1103 = vmatpush2.msra.mxu0 %v569
    %1104 = vmatprep.subr.mxu0 %v568
    %1105 = vmatpush2.msra.mxu0 %v567
    %1106 = vmatprep.subr.mxu0 %v566
    %1107 = vmatpush2.msra.mxu0 %v565
    %1108 = vmatprep.subr.mxu0 %v564
    %1109 = vmatpush2.msra.mxu0 %v563
    %1110 = vmatprep.subr.mxu0 %v562
    %1111 = vmatpush2.msra.mxu0 %v561
    %1112 = vmatprep.subr.mxu0 %v560
    %1113 = vmatpush2.msra.mxu0 %v559
    %1114 = vmatprep.subr.mxu0 %v558
    %1115 = vmatpush2.msra.mxu0 %v557
    %1116 = vmatprep.subr.mxu0 %v556
    %1117 = vmatpush2.msra.mxu0 %v555
    %1118 = vmatprep.subr.mxu0 %v554
    %1119 = vmatpush2.msra.mxu0 %v553
    %1120 = vmatprep.subr.mxu0 %v552
    %1121 = vmatpush2.msra.mxu0 %v551
    %1122 = vmatprep.subr.mxu0 %v550
    %1123 = vmatpush2.msra.mxu0 %v549
    %1124 = vmatprep.mubr.f32.mxu0 %v234
    %1125 = vmatmul.mubr.f32.gmra.mxu0 %v233
    %v1126 = vpop.f32.mrf.mxu0
    %v1127 = vadd.f32 %v942, %v1126
    %v1128 = vpop.f32.mrf.mxu0
    %v1129 = vadd.f32 %v944, %v1128
    %1130 = vmatprep.mubr.f32.mxu0 %v242
    %1131 = vmatmul.mubr.f32.gmra.mxu0 %v241
    %v1132 = vpop.f32.mrf.mxu0
    %v1133 = vadd.f32 %v948, %v1132
    %v1134 = vpop.f32.mrf.mxu0
    %v1135 = vadd.f32 %v950, %v1134
    %1136 = vmatprep.mubr.f32.mxu0 %v250
    %1137 = vmatmul.mubr.f32.gmra.mxu0 %v249
    %v1138 = vpop.f32.mrf.mxu0
    %v1139 = vadd.f32 %v954, %v1138
    %v1140 = vpop.f32.mrf.mxu0
    %v1141 = vadd.f32 %v956, %v1140
    %1142 = vmatprep.mubr.f32.mxu0 %v258
    %1143 = vmatmul.mubr.f32.gmra.mxu0 %v257
    %v1144 = vpop.f32.mrf.mxu0
    %v1145 = vadd.f32 %v960, %v1144
    %v1146 = vpop.f32.mrf.mxu0
    %v1147 = vadd.f32 %v962, %v1146
    %1148 = vmatprep.mubr.f32.mxu0 %v266
    %1149 = vmatmul.mubr.f32.gmra.mxu0 %v265
    %v1150 = vpop.f32.mrf.mxu0
    %v1151 = vadd.f32 %v966, %v1150
    %v1152 = vpop.f32.mrf.mxu0
    %v1153 = vadd.f32 %v968, %v1152
    %1154 = vmatprep.mubr.f32.mxu0 %v274
    %1155 = vmatmul.mubr.f32.gmra.mxu0 %v273
    %v1156 = vpop.f32.mrf.mxu0
    %v1157 = vadd.f32 %v972, %v1156
    %v1158 = vpop.f32.mrf.mxu0
    %v1159 = vadd.f32 %v974, %v1158
    %1160 = vmatprep.mubr.f32.mxu0 %v282
    %1161 = vmatmul.mubr.f32.gmra.mxu0 %v281
    %v1162 = vpop.f32.mrf.mxu0
    %v1163 = vadd.f32 %v978, %v1162
    %v1164 = vpop.f32.mrf.mxu0
    %v1165 = vadd.f32 %v980, %v1164
    %1166 = vmatprep.mubr.f32.mxu0 %v290
    %1167 = vmatmul.mubr.f32.gmra.mxu0 %v289
    %v1168 = vpop.f32.mrf.mxu0
    %v1169 = vadd.f32 %v984, %v1168
    %v1170 = vpop.f32.mrf.mxu0
    %v1171 = vadd.f32 %v986, %v1170
    %1172 = vmatprep.mubr.f32.mxu0 %v298
    %1173 = vmatmul.mubr.f32.gmra.mxu0 %v297
    %v1174 = vpop.f32.mrf.mxu0
    %v1175 = vadd.f32 %v990, %v1174
    %v1176 = vpop.f32.mrf.mxu0
    %v1177 = vadd.f32 %v992, %v1176
    %1178 = vmatprep.mubr.f32.mxu0 %v306
    %1179 = vmatmul.mubr.f32.gmra.mxu0 %v305
    %v1180 = vpop.f32.mrf.mxu0
    %v1181 = vadd.f32 %v996, %v1180
    %v1182 = vpop.f32.mrf.mxu0
    %v1183 = vadd.f32 %v998, %v1182
    %1184 = vmatprep.mubr.f32.mxu0 %v314
    %1185 = vmatmul.mubr.f32.gmra.mxu0 %v313
    %v1186 = vpop.f32.mrf.mxu0
    %v1187 = vadd.f32 %v1002, %v1186
    %v1188 = vpop.f32.mrf.mxu0
    %v1189 = vadd.f32 %v1004, %v1188
    %1190 = vmatprep.mubr.f32.mxu0 %v322
    %1191 = vmatmul.mubr.f32.gmra.mxu0 %v321
    %v1192 = vpop.f32.mrf.mxu0
    %v1193 = vadd.f32 %v1008, %v1192
    %v1194 = vpop.f32.mrf.mxu0
    %v1195 = vadd.f32 %v1010, %v1194
    %1196 = vmatprep.mubr.f32.mxu0 %v330
    %1197 = vmatmul.mubr.f32.gmra.mxu0 %v329
    %v1198 = vpop.f32.mrf.mxu0
    %v1199 = vadd.f32 %v1014, %v1198
    %v1200 = vpop.f32.mrf.mxu0
    %v1201 = vadd.f32 %v1016, %v1200
    %1202 = vmatprep.mubr.f32.mxu0 %v338
    %1203 = vmatmul.mubr.f32.gmra.mxu0 %v337
    %v1204 = vpop.f32.mrf.mxu0
    %v1205 = vadd.f32 %v1020, %v1204
    %v1206 = vpop.f32.mrf.mxu0
    %v1207 = vadd.f32 %v1022, %v1206
    %1208 = vmatprep.mubr.f32.mxu0 %v346
    %1209 = vmatmul.mubr.f32.gmra.mxu0 %v345
    %v1210 = vpop.f32.mrf.mxu0
    %v1211 = vadd.f32 %v1026, %v1210
    %v1212 = vpop.f32.mrf.mxu0
    %v1213 = vadd.f32 %v1028, %v1212
    %1214 = vmatprep.mubr.f32.mxu0 %v354
    %1215 = vmatmul.mubr.f32.gmra.mxu0 %v353
    %v1216 = vpop.f32.mrf.mxu0
    %v1217 = vadd.f32 %v1032, %v1216
    %v1218 = vpop.f32.mrf.mxu0
    %v1219 = vadd.f32 %v1034, %v1218
    %1220 = vmatprep.mubr.f32.mxu0 %v362
    %1221 = vmatmul.mubr.f32.gmra.mxu0 %v361
    %v1222 = vpop.f32.mrf.mxu0
    %v1223 = vadd.f32 %v1038, %v1222
    %v1224 = vpop.f32.mrf.mxu0
    %v1225 = vadd.f32 %v1040, %v1224
    %1226 = vmatprep.mubr.f32.mxu0 %v370
    %1227 = vmatmul.mubr.f32.gmra.mxu0 %v369
    %v1228 = vpop.f32.mrf.mxu0
    %v1229 = vadd.f32 %v1044, %v1228
    %v1230 = vpop.f32.mrf.mxu0
    %v1231 = vadd.f32 %v1046, %v1230
    %1232 = vmatprep.mubr.f32.mxu0 %v378
    %1233 = vmatmul.mubr.f32.gmra.mxu0 %v377
    %v1234 = vpop.f32.mrf.mxu0
    %v1235 = vadd.f32 %v1050, %v1234
    %v1236 = vpop.f32.mrf.mxu0
    %v1237 = vadd.f32 %v1052, %v1236
    %1238 = vmatprep.mubr.f32.mxu0 %v386
    %1239 = vmatmul.mubr.f32.gmra.mxu0 %v385
    %v1240 = vpop.f32.mrf.mxu0
    %v1241 = vadd.f32 %v1056, %v1240
    %v1242 = vpop.f32.mrf.mxu0
    %v1243 = vadd.f32 %v1058, %v1242
    %1244 = vdwg.mxu0
    %1245 = vmatprep.subr.mxu0 %v612
    %1246 = vmatpush1.msra.mxu0 %v611
    %1247 = vmatprep.subr.mxu0 %v610
    %1248 = vmatpush1.msra.mxu0 %v609
    %1249 = vmatprep.subr.mxu0 %v608
    %1250 = vmatpush1.msra.mxu0 %v607
    %1251 = vmatprep.subr.mxu0 %v606
    %1252 = vmatpush1.msra.mxu0 %v605
    %1253 = vmatprep.subr.mxu0 %v604
    %1254 = vmatpush1.msra.mxu0 %v603
    %1255 = vmatprep.subr.mxu0 %v602
    %1256 = vmatpush1.msra.mxu0 %v601
    %1257 = vmatprep.subr.mxu0 %v600
    %1258 = vmatpush1.msra.mxu0 %v599
    %1259 = vmatprep.subr.mxu0 %v598
    %1260 = vmatpush1.msra.mxu0 %v597
    %1261 = vmatprep.subr.mxu0 %v596
    %1262 = vmatpush1.msra.mxu0 %v595
    %1263 = vmatprep.subr.mxu0 %v594
    %1264 = vmatpush1.msra.mxu0 %v593
    %1265 = vmatprep.subr.mxu0 %v592
    %1266 = vmatpush1.msra.mxu0 %v591
    %1267 = vmatprep.subr.mxu0 %v590
    %1268 = vmatpush1.msra.mxu0 %v589
    %1269 = vmatprep.subr.mxu0 %v588
    %1270 = vmatpush1.msra.mxu0 %v587
    %1271 = vmatprep.subr.mxu0 %v586
    %1272 = vmatpush1.msra.mxu0 %v585
    %1273 = vmatprep.subr.mxu0 %v584
    %1274 = vmatpush1.msra.mxu0 %v583
    %1275 = vmatprep.subr.mxu0 %v582
    %1276 = vmatpush1.msra.mxu0 %v581
    %1277 = vmatprep.subr.mxu0 0.0
    %1278 = vmatpush2.msra.mxu0 0.0
    %1279 = vmatprep.subr.mxu0 0.0
    %1280 = vmatpush2.msra.mxu0 0.0
    %1281 = vmatprep.subr.mxu0 0.0
    %1282 = vmatpush2.msra.mxu0 0.0
    %1283 = vmatprep.subr.mxu0 0.0
    %1284 = vmatpush2.msra.mxu0 0.0
    %1285 = vmatprep.subr.mxu0 0.0
    %1286 = vmatpush2.msra.mxu0 0.0
    %1287 = vmatprep.subr.mxu0 0.0
    %1288 = vmatpush2.msra.mxu0 0.0
    %1289 = vmatprep.subr.mxu0 0.0
    %1290 = vmatpush2.msra.mxu0 0.0
    %1291 = vmatprep.subr.mxu0 0.0
    %1292 = vmatpush2.msra.mxu0 0.0
    %1293 = vmatprep.subr.mxu0 %v628
    %1294 = vmatpush2.msra.mxu0 %v627
    %1295 = vmatprep.subr.mxu0 %v626
    %1296 = vmatpush2.msra.mxu0 %v625
    %1297 = vmatprep.subr.mxu0 %v624
    %1298 = vmatpush2.msra.mxu0 %v623
    %1299 = vmatprep.subr.mxu0 %v622
    %1300 = vmatpush2.msra.mxu0 %v621
    %1301 = vmatprep.subr.mxu0 %v620
    %1302 = vmatpush2.msra.mxu0 %v619
    %1303 = vmatprep.subr.mxu0 %v618
    %1304 = vmatpush2.msra.mxu0 %v617
    %1305 = vmatprep.subr.mxu0 %v616
    %1306 = vmatpush2.msra.mxu0 %v615
    %1307 = vmatprep.subr.mxu0 %v614
    %1308 = vmatpush2.msra.mxu0 %v613
    %1309 = vmatprep.mubr.f32.mxu0 %v631
    %1310 = vmatmul.mubr.f32.gmra.mxu0 %v235
    %v1311 = vpop.f32.mrf.mxu0
    %v1312 = vadd.f32 %v1127, %v1311
    %v1313 = vpop.f32.mrf.mxu0
    %v1314 = vadd.f32 %v1129, %v1313
    %1315 = vmatprep.mubr.f32.mxu0 %v634
    %1316 = vmatmul.mubr.f32.gmra.mxu0 %v243
    %v1317 = vpop.f32.mrf.mxu0
    %v1318 = vadd.f32 %v1133, %v1317
    %v1319 = vpop.f32.mrf.mxu0
    %v1320 = vadd.f32 %v1135, %v1319
    %1321 = vmatprep.mubr.f32.mxu0 %v637
    %1322 = vmatmul.mubr.f32.gmra.mxu0 %v251
    %v1323 = vpop.f32.mrf.mxu0
    %v1324 = vadd.f32 %v1139, %v1323
    %v1325 = vpop.f32.mrf.mxu0
    %v1326 = vadd.f32 %v1141, %v1325
    %1327 = vmatprep.mubr.f32.mxu0 %v640
    %1328 = vmatmul.mubr.f32.gmra.mxu0 %v259
    %v1329 = vpop.f32.mrf.mxu0
    %v1330 = vadd.f32 %v1145, %v1329
    %v1331 = vpop.f32.mrf.mxu0
    %v1332 = vadd.f32 %v1147, %v1331
    %1333 = vmatprep.mubr.f32.mxu0 %v643
    %1334 = vmatmul.mubr.f32.gmra.mxu0 %v267
    %v1335 = vpop.f32.mrf.mxu0
    %v1336 = vadd.f32 %v1151, %v1335
    %v1337 = vpop.f32.mrf.mxu0
    %v1338 = vadd.f32 %v1153, %v1337
    %1339 = vmatprep.mubr.f32.mxu0 %v646
    %1340 = vmatmul.mubr.f32.gmra.mxu0 %v275
    %v1341 = vpop.f32.mrf.mxu0
    %v1342 = vadd.f32 %v1157, %v1341
    %v1343 = vpop.f32.mrf.mxu0
    %v1344 = vadd.f32 %v1159, %v1343
    %1345 = vmatprep.mubr.f32.mxu0 %v649
    %1346 = vmatmul.mubr.f32.gmra.mxu0 %v283
    %v1347 = vpop.f32.mrf.mxu0
    %v1348 = vadd.f32 %v1163, %v1347
    %v1349 = vpop.f32.mrf.mxu0
    %v1350 = vadd.f32 %v1165, %v1349
    %1351 = vmatprep.mubr.f32.mxu0 %v652
    %1352 = vmatmul.mubr.f32.gmra.mxu0 %v291
    %v1353 = vpop.f32.mrf.mxu0
    %v1354 = vadd.f32 %v1169, %v1353
    %v1355 = vpop.f32.mrf.mxu0
    %v1356 = vadd.f32 %v1171, %v1355
    %1357 = vmatprep.mubr.f32.mxu0 %v655
    %1358 = vmatmul.mubr.f32.gmra.mxu0 %v299
    %v1359 = vpop.f32.mrf.mxu0
    %v1360 = vadd.f32 %v1175, %v1359
    %v1361 = vpop.f32.mrf.mxu0
    %v1362 = vadd.f32 %v1177, %v1361
    %1363 = vmatprep.mubr.f32.mxu0 %v658
    %1364 = vmatmul.mubr.f32.gmra.mxu0 %v307
    %v1365 = vpop.f32.mrf.mxu0
    %v1366 = vadd.f32 %v1181, %v1365
    %v1367 = vpop.f32.mrf.mxu0
    %v1368 = vadd.f32 %v1183, %v1367
    %1369 = vmatprep.mubr.f32.mxu0 %v661
    %1370 = vmatmul.mubr.f32.gmra.mxu0 %v315
    %v1371 = vpop.f32.mrf.mxu0
    %v1372 = vadd.f32 %v1187, %v1371
    %v1373 = vpop.f32.mrf.mxu0
    %v1374 = vadd.f32 %v1189, %v1373
    %1375 = vmatprep.mubr.f32.mxu0 %v664
    %1376 = vmatmul.mubr.f32.gmra.mxu0 %v323
    %v1377 = vpop.f32.mrf.mxu0
    %v1378 = vadd.f32 %v1193, %v1377
    %v1379 = vpop.f32.mrf.mxu0
    %v1380 = vadd.f32 %v1195, %v1379
    %1381 = vmatprep.mubr.f32.mxu0 %v667
    %1382 = vmatmul.mubr.f32.gmra.mxu0 %v331
    %v1383 = vpop.f32.mrf.mxu0
    %v1384 = vadd.f32 %v1199, %v1383
    %v1385 = vpop.f32.mrf.mxu0
    %v1386 = vadd.f32 %v1201, %v1385
    %1387 = vmatprep.mubr.f32.mxu0 %v670
    %1388 = vmatmul.mubr.f32.gmra.mxu0 %v339
    %v1389 = vpop.f32.mrf.mxu0
    %v1390 = vadd.f32 %v1205, %v1389
    %v1391 = vpop.f32.mrf.mxu0
    %v1392 = vadd.f32 %v1207, %v1391
    %1393 = vmatprep.mubr.f32.mxu0 %v673
    %1394 = vmatmul.mubr.f32.gmra.mxu0 %v347
    %v1395 = vpop.f32.mrf.mxu0
    %v1396 = vadd.f32 %v1211, %v1395
    %v1397 = vpop.f32.mrf.mxu0
    %v1398 = vadd.f32 %v1213, %v1397
    %1399 = vmatprep.mubr.f32.mxu0 %v676
    %1400 = vmatmul.mubr.f32.gmra.mxu0 %v355
    %v1401 = vpop.f32.mrf.mxu0
    %v1402 = vadd.f32 %v1217, %v1401
    %v1403 = vpop.f32.mrf.mxu0
    %v1404 = vadd.f32 %v1219, %v1403
    %1405 = vmatprep.mubr.f32.mxu0 %v679
    %1406 = vmatmul.mubr.f32.gmra.mxu0 %v363
    %v1407 = vpop.f32.mrf.mxu0
    %v1408 = vadd.f32 %v1223, %v1407
    %v1409 = vpop.f32.mrf.mxu0
    %v1410 = vadd.f32 %v1225, %v1409
    %1411 = vmatprep.mubr.f32.mxu0 %v682
    %1412 = vmatmul.mubr.f32.gmra.mxu0 %v371
    %v1413 = vpop.f32.mrf.mxu0
    %v1414 = vadd.f32 %v1229, %v1413
    %v1415 = vpop.f32.mrf.mxu0
    %v1416 = vadd.f32 %v1231, %v1415
    %1417 = vmatprep.mubr.f32.mxu0 %v685
    %1418 = vmatmul.mubr.f32.gmra.mxu0 %v379
    %v1419 = vpop.f32.mrf.mxu0
    %v1420 = vadd.f32 %v1235, %v1419
    %v1421 = vpop.f32.mrf.mxu0
    %v1422 = vadd.f32 %v1237, %v1421
    %1423 = vmatprep.mubr.f32.mxu0 %v688
    %1424 = vmatmul.mubr.f32.gmra.mxu0 %v387
    %v1425 = vpop.f32.mrf.mxu0
    %v1426 = vadd.f32 %v1241, %v1425
    %v1427 = vpop.f32.mrf.mxu0
    %v1428 = vadd.f32 %v1243, %v1427
    %1429 = vdwg.mxu0
    %vm1430 = vcmask 556032
    %v1431 = vsel %vm1430, %v1314, 0.0
    %v1432 = vadd.f32 %v1312, %v1431
    %1433 = vadd.xlane.f32.xlu0 %v1432
    %v1434 = vpop.xlane.xlu0 %1433
    %v1435 = vsel %vm1430, %v1320, 0.0
    %v1436 = vadd.f32 %v1318, %v1435
    %1437 = vadd.xlane.f32.xlu0 %v1436
    %v1438 = vpop.xlane.xlu0 %1437
    %v1439 = vsel %vm1430, %v1326, 0.0
    %v1440 = vadd.f32 %v1324, %v1439
    %1441 = vadd.xlane.f32.xlu0 %v1440
    %v1442 = vpop.xlane.xlu0 %1441
    %v1443 = vsel %vm1430, %v1332, 0.0
    %v1444 = vadd.f32 %v1330, %v1443
    %1445 = vadd.xlane.f32.xlu0 %v1444
    %v1446 = vpop.xlane.xlu0 %1445
    %v1447 = vsel %vm1430, %v1338, 0.0
    %v1448 = vadd.f32 %v1336, %v1447
    %1449 = vadd.xlane.f32.xlu0 %v1448
    %v1450 = vpop.xlane.xlu0 %1449
    %v1451 = vsel %vm1430, %v1344, 0.0
    %v1452 = vadd.f32 %v1342, %v1451
    %1453 = vadd.xlane.f32.xlu0 %v1452
    %v1454 = vpop.xlane.xlu0 %1453
    %v1455 = vsel %vm1430, %v1350, 0.0
    %v1456 = vadd.f32 %v1348, %v1455
    %1457 = vadd.xlane.f32.xlu0 %v1456
    %v1458 = vpop.xlane.xlu0 %1457
    %v1459 = vsel %vm1430, %v1356, 0.0
    %v1460 = vadd.f32 %v1354, %v1459
    %1461 = vadd.xlane.f32.xlu0 %v1460
    %v1462 = vpop.xlane.xlu0 %1461
    %v1463 = vsel %vm1430, %v1362, 0.0
    %v1464 = vadd.f32 %v1360, %v1463
    %1465 = vadd.xlane.f32.xlu0 %v1464
    %v1466 = vpop.xlane.xlu0 %1465
    %v1467 = vsel %vm1430, %v1368, 0.0
    %v1468 = vadd.f32 %v1366, %v1467
    %1469 = vadd.xlane.f32.xlu0 %v1468
    %v1470 = vpop.xlane.xlu0 %1469
    %v1471 = vsel %vm1430, %v1374, 0.0
    %v1472 = vadd.f32 %v1372, %v1471
    %1473 = vadd.xlane.f32.xlu0 %v1472
    %v1474 = vpop.xlane.xlu0 %1473
    %v1475 = vsel %vm1430, %v1380, 0.0
    %v1476 = vadd.f32 %v1378, %v1475
    %1477 = vadd.xlane.f32.xlu0 %v1476
    %v1478 = vpop.xlane.xlu0 %1477
    %v1479 = vsel %vm1430, %v1386, 0.0
    %v1480 = vadd.f32 %v1384, %v1479
    %1481 = vadd.xlane.f32.xlu0 %v1480
    %v1482 = vpop.xlane.xlu0 %1481
    %v1483 = vsel %vm1430, %v1392, 0.0
    %v1484 = vadd.f32 %v1390, %v1483
    %1485 = vadd.xlane.f32.xlu0 %v1484
    %v1486 = vpop.xlane.xlu0 %1485
    %v1487 = vsel %vm1430, %v1398, 0.0
    %v1488 = vadd.f32 %v1396, %v1487
    %1489 = vadd.xlane.f32.xlu0 %v1488
    %v1490 = vpop.xlane.xlu0 %1489
    %v1491 = vsel %vm1430, %v1404, 0.0
    %v1492 = vadd.f32 %v1402, %v1491
    %1493 = vadd.xlane.f32.xlu0 %v1492
    %v1494 = vpop.xlane.xlu0 %1493
    %v1495 = vsel %vm1430, %v1410, 0.0
    %v1496 = vadd.f32 %v1408, %v1495
    %1497 = vadd.xlane.f32.xlu0 %v1496
    %v1498 = vpop.xlane.xlu0 %1497
    %v1499 = vsel %vm1430, %v1416, 0.0
    %v1500 = vadd.f32 %v1414, %v1499
    %1501 = vadd.xlane.f32.xlu0 %v1500
    %v1502 = vpop.xlane.xlu0 %1501
    %v1503 = vsel %vm1430, %v1422, 0.0
    %v1504 = vadd.f32 %v1420, %v1503
    %1505 = vadd.xlane.f32.xlu0 %v1504
    %v1506 = vpop.xlane.xlu0 %1505
    %v1507 = vsel %vm1430, %v1428, 0.0
    %v1508 = vadd.f32 %v1426, %v1507
    %1509 = vadd.xlane.f32.xlu0 %v1508
    %v1510 = vpop.xlane.xlu0 %1509
    %v1511 = vrcp.pop 196.0
    %v1512 = vmul.f32 %v1434, %v1511
    %v1513 = vmul.f32 %v1438, %v1511
    %v1514 = vmul.f32 %v1442, %v1511
    %v1515 = vmul.f32 %v1446, %v1511
    %v1516 = vmul.f32 %v1450, %v1511
    %v1517 = vmul.f32 %v1454, %v1511
    %v1518 = vmul.f32 %v1458, %v1511
    %v1519 = vmul.f32 %v1462, %v1511
    %v1520 = vmul.f32 %v1466, %v1511
    %v1521 = vmul.f32 %v1470, %v1511
    %v1522 = vmul.f32 %v1474, %v1511
    %v1523 = vmul.f32 %v1478, %v1511
    %v1524 = vmul.f32 %v1482, %v1511
    %v1525 = vmul.f32 %v1486, %v1511
    %v1526 = vmul.f32 %v1490, %v1511
    %v1527 = vmul.f32 %v1494, %v1511
    %v1528 = vmul.f32 %v1498, %v1511
    %v1529 = vmul.f32 %v1502, %v1511
    %v1530 = vmul.f32 %v1506, %v1511
    %v1531 = vmul.f32 %v1510, %v1511
    %v1532 = vmul.f32 %v1312, %v1312
    %v1533 = vmul.f32 %v1314, %v1314
    %v1534 = vmul.f32 %v1318, %v1318
    %v1535 = vmul.f32 %v1320, %v1320
    %v1536 = vmul.f32 %v1324, %v1324
    %v1537 = vmul.f32 %v1326, %v1326
    %v1538 = vmul.f32 %v1330, %v1330
    %v1539 = vmul.f32 %v1332, %v1332
    %v1540 = vmul.f32 %v1336, %v1336
    %v1541 = vmul.f32 %v1338, %v1338
    %v1542 = vmul.f32 %v1342, %v1342
    %v1543 = vmul.f32 %v1344, %v1344
    %v1544 = vmul.f32 %v1348, %v1348
    %v1545 = vmul.f32 %v1350, %v1350
    %v1546 = vmul.f32 %v1354, %v1354
    %v1547 = vmul.f32 %v1356, %v1356
    %v1548 = vmul.f32 %v1360, %v1360
    %v1549 = vmul.f32 %v1362, %v1362
    %v1550 = vmul.f32 %v1366, %v1366
    %v1551 = vmul.f32 %v1368, %v1368
    %v1552 = vmul.f32 %v1372, %v1372
    %v1553 = vmul.f32 %v1374, %v1374
    %v1554 = vmul.f32 %v1378, %v1378
    %v1555 = vmul.f32 %v1380, %v1380
    %v1556 = vmul.f32 %v1384, %v1384
    %v1557 = vmul.f32 %v1386, %v1386
    %v1558 = vmul.f32 %v1390, %v1390
    %v1559 = vmul.f32 %v1392, %v1392
    %v1560 = vmul.f32 %v1396, %v1396
    %v1561 = vmul.f32 %v1398, %v1398
    %v1562 = vmul.f32 %v1402, %v1402
    %v1563 = vmul.f32 %v1404, %v1404
    %v1564 = vmul.f32 %v1408, %v1408
    %v1565 = vmul.f32 %v1410, %v1410
    %v1566 = vmul.f32 %v1414, %v1414
    %v1567 = vmul.f32 %v1416, %v1416
    %v1568 = vmul.f32 %v1420, %v1420
    %v1569 = vmul.f32 %v1422, %v1422
    %v1570 = vmul.f32 %v1426, %v1426
    %v1571 = vmul.f32 %v1428, %v1428
    %v1572 = vsel %vm1430, %v1533, 0.0
    %v1573 = vadd.f32 %v1532, %v1572
    %1574 = vadd.xlane.f32.xlu0 %v1573
    %v1575 = vpop.xlane.xlu0 %1574
    %v1576 = vsel %vm1430, %v1535, 0.0
    %v1577 = vadd.f32 %v1534, %v1576
    %1578 = vadd.xlane.f32.xlu0 %v1577
    %v1579 = vpop.xlane.xlu0 %1578
    %v1580 = vsel %vm1430, %v1537, 0.0
    %v1581 = vadd.f32 %v1536, %v1580
    %1582 = vadd.xlane.f32.xlu0 %v1581
    %v1583 = vpop.xlane.xlu0 %1582
    %v1584 = vsel %vm1430, %v1539, 0.0
    %v1585 = vadd.f32 %v1538, %v1584
    %1586 = vadd.xlane.f32.xlu0 %v1585
    %v1587 = vpop.xlane.xlu0 %1586
    %v1588 = vsel %vm1430, %v1541, 0.0
    %v1589 = vadd.f32 %v1540, %v1588
    %1590 = vadd.xlane.f32.xlu0 %v1589
    %v1591 = vpop.xlane.xlu0 %1590
    %v1592 = vsel %vm1430, %v1543, 0.0
    %v1593 = vadd.f32 %v1542, %v1592
    %1594 = vadd.xlane.f32.xlu0 %v1593
    %v1595 = vpop.xlane.xlu0 %1594
    %v1596 = vsel %vm1430, %v1545, 0.0
    %v1597 = vadd.f32 %v1544, %v1596
    %1598 = vadd.xlane.f32.xlu0 %v1597
    %v1599 = vpop.xlane.xlu0 %1598
    %v1600 = vsel %vm1430, %v1547, 0.0
    %v1601 = vadd.f32 %v1546, %v1600
    %1602 = vadd.xlane.f32.xlu0 %v1601
    %v1603 = vpop.xlane.xlu0 %1602
    %v1604 = vsel %vm1430, %v1549, 0.0
    %v1605 = vadd.f32 %v1548, %v1604
    %1606 = vadd.xlane.f32.xlu0 %v1605
    %v1607 = vpop.xlane.xlu0 %1606
    %v1608 = vsel %vm1430, %v1551, 0.0
    %v1609 = vadd.f32 %v1550, %v1608
    %1610 = vadd.xlane.f32.xlu0 %v1609
    %v1611 = vpop.xlane.xlu0 %1610
    %v1612 = vsel %vm1430, %v1553, 0.0
    %v1613 = vadd.f32 %v1552, %v1612
    %1614 = vadd.xlane.f32.xlu0 %v1613
    %v1615 = vpop.xlane.xlu0 %1614
    %v1616 = vsel %vm1430, %v1555, 0.0
    %v1617 = vadd.f32 %v1554, %v1616
    %1618 = vadd.xlane.f32.xlu0 %v1617
    %v1619 = vpop.xlane.xlu0 %1618
    %v1620 = vsel %vm1430, %v1557, 0.0
    %v1621 = vadd.f32 %v1556, %v1620
    %1622 = vadd.xlane.f32.xlu0 %v1621
    %v1623 = vpop.xlane.xlu0 %1622
    %v1624 = vsel %vm1430, %v1559, 0.0
    %v1625 = vadd.f32 %v1558, %v1624
    %1626 = vadd.xlane.f32.xlu0 %v1625
    %v1627 = vpop.xlane.xlu0 %1626
    %v1628 = vsel %vm1430, %v1561, 0.0
    %v1629 = vadd.f32 %v1560, %v1628
    %1630 = vadd.xlane.f32.xlu0 %v1629
    %v1631 = vpop.xlane.xlu0 %1630
    %v1632 = vsel %vm1430, %v1563, 0.0
    %v1633 = vadd.f32 %v1562, %v1632
    %1634 = vadd.xlane.f32.xlu0 %v1633
    %v1635 = vpop.xlane.xlu0 %1634
    %v1636 = vsel %vm1430, %v1565, 0.0
    %v1637 = vadd.f32 %v1564, %v1636
    %1638 = vadd.xlane.f32.xlu0 %v1637
    %v1639 = vpop.xlane.xlu0 %1638
    %v1640 = vsel %vm1430, %v1567, 0.0
    %v1641 = vadd.f32 %v1566, %v1640
    %1642 = vadd.xlane.f32.xlu0 %v1641
    %v1643 = vpop.xlane.xlu0 %1642
    %v1644 = vsel %vm1430, %v1569, 0.0
    %v1645 = vadd.f32 %v1568, %v1644
    %1646 = vadd.xlane.f32.xlu0 %v1645
    %v1647 = vpop.xlane.xlu0 %1646
    %v1648 = vsel %vm1430, %v1571, 0.0
    %v1649 = vadd.f32 %v1570, %v1648
    %1650 = vadd.xlane.f32.xlu0 %v1649
    %v1651 = vpop.xlane.xlu0 %1650
    %v1652 = vmul.f32 %v1575, %v1511
    %v1653 = vmul.f32 %v1579, %v1511
    %v1654 = vmul.f32 %v1583, %v1511
    %v1655 = vmul.f32 %v1587, %v1511
    %v1656 = vmul.f32 %v1591, %v1511
    %v1657 = vmul.f32 %v1595, %v1511
    %v1658 = vmul.f32 %v1599, %v1511
    %v1659 = vmul.f32 %v1603, %v1511
    %v1660 = vmul.f32 %v1607, %v1511
    %v1661 = vmul.f32 %v1611, %v1511
    %v1662 = vmul.f32 %v1615, %v1511
    %v1663 = vmul.f32 %v1619, %v1511
    %v1664 = vmul.f32 %v1623, %v1511
    %v1665 = vmul.f32 %v1627, %v1511
    %v1666 = vmul.f32 %v1631, %v1511
    %v1667 = vmul.f32 %v1635, %v1511
    %v1668 = vmul.f32 %v1639, %v1511
    %v1669 = vmul.f32 %v1643, %v1511
    %v1670 = vmul.f32 %v1647, %v1511
    %v1671 = vmul.f32 %v1651, %v1511
    %v1672 = vmul.f32 %v1512, %v1512
    %v1673 = vmul.f32 %v1513, %v1513
    %v1674 = vmul.f32 %v1514, %v1514
    %v1675 = vmul.f32 %v1515, %v1515
    %v1676 = vmul.f32 %v1516, %v1516
    %v1677 = vmul.f32 %v1517, %v1517
    %v1678 = vmul.f32 %v1518, %v1518
    %v1679 = vmul.f32 %v1519, %v1519
    %v1680 = vmul.f32 %v1520, %v1520
    %v1681 = vmul.f32 %v1521, %v1521
    %v1682 = vmul.f32 %v1522, %v1522
    %v1683 = vmul.f32 %v1523, %v1523
    %v1684 = vmul.f32 %v1524, %v1524
    %v1685 = vmul.f32 %v1525, %v1525
    %v1686 = vmul.f32 %v1526, %v1526
    %v1687 = vmul.f32 %v1527, %v1527
    %v1688 = vmul.f32 %v1528, %v1528
    %v1689 = vmul.f32 %v1529, %v1529
    %v1690 = vmul.f32 %v1530, %v1530
    %v1691 = vmul.f32 %v1531, %v1531
    %v1692 = vsub.f32 %v1652, %v1672
    %v1693 = vsub.f32 %v1653, %v1673
    %v1694 = vsub.f32 %v1654, %v1674
    %v1695 = vsub.f32 %v1655, %v1675
    %v1696 = vsub.f32 %v1656, %v1676
    %v1697 = vsub.f32 %v1657, %v1677
    %v1698 = vsub.f32 %v1658, %v1678
    %v1699 = vsub.f32 %v1659, %v1679
    %v1700 = vsub.f32 %v1660, %v1680
    %v1701 = vsub.f32 %v1661, %v1681
    %v1702 = vsub.f32 %v1662, %v1682
    %v1703 = vsub.f32 %v1663, %v1683
    %v1704 = vsub.f32 %v1664, %v1684
    %v1705 = vsub.f32 %v1665, %v1685
    %v1706 = vsub.f32 %v1666, %v1686
    %v1707 = vsub.f32 %v1667, %v1687
    %v1708 = vsub.f32 %v1668, %v1688
    %v1709 = vsub.f32 %v1669, %v1689
    %v1710 = vsub.f32 %v1670, %v1690
    %v1711 = vsub.f32 %v1671, %v1691
    %v1712 = vld [vmem:[%s3] sm:$0xff]
    %v1713 = vld [vmem:[%s3 + $0x8] sm:$0xff]
    %v1714 = vld [vmem:[%s3 + $0x10] sm:$0xff]
    %v1715 = vld [vmem:[%s3 + $0x18] sm:$0xff]
    %v1716 = vld [vmem:[%s3 + $0x20] sm:$0xff]
    %v1717 = vld [vmem:[%s3 + $0x28] sm:$0xff]
    %v1718 = vld [vmem:[%s3 + $0x30] sm:$0xff]
    %v1719 = vld [vmem:[%s3 + $0x38] sm:$0xff]
    %v1720 = vld [vmem:[%s3 + $0x40] sm:$0xff]
    %v1721 = vld [vmem:[%s3 + $0x48] sm:$0xff]
    %v1722 = vld [vmem:[%s3 + $0x50] sm:$0xff]
    %v1723 = vld [vmem:[%s3 + $0x58] sm:$0xff]
    %v1724 = vld [vmem:[%s3 + $0x60] sm:$0xff]
    %v1725 = vld [vmem:[%s3 + $0x68] sm:$0xff]
    %v1726 = vld [vmem:[%s3 + $0x70] sm:$0xff]
    %v1727 = vld [vmem:[%s3 + $0x78] sm:$0xff]
    %v1728 = vld [vmem:[%s3 + $0x80] sm:$0xff]
    %v1729 = vld [vmem:[%s3 + $0x88] sm:$0xff]
    %v1730 = vld [vmem:[%s3 + $0x90] sm:$0xff]
    %v1731 = vld [vmem:[%s3 + $0x98] sm:$0xff]
    %v1732 = vadd.f32 %v1692, 1e-05
    %v1733 = vadd.f32 %v1693, 1e-05
    %v1734 = vadd.f32 %v1694, 1e-05
    %v1735 = vadd.f32 %v1695, 1e-05
    %v1736 = vadd.f32 %v1696, 1e-05
    %v1737 = vadd.f32 %v1697, 1e-05
    %v1738 = vadd.f32 %v1698, 1e-05
    %v1739 = vadd.f32 %v1699, 1e-05
    %v1740 = vadd.f32 %v1700, 1e-05
    %v1741 = vadd.f32 %v1701, 1e-05
    %v1742 = vadd.f32 %v1702, 1e-05
    %v1743 = vadd.f32 %v1703, 1e-05
    %v1744 = vadd.f32 %v1704, 1e-05
    %v1745 = vadd.f32 %v1705, 1e-05
    %v1746 = vadd.f32 %v1706, 1e-05
    %v1747 = vadd.f32 %v1707, 1e-05
    %v1748 = vadd.f32 %v1708, 1e-05
    %v1749 = vadd.f32 %v1709, 1e-05
    %v1750 = vadd.f32 %v1710, 1e-05
    %v1751 = vadd.f32 %v1711, 1e-05
    %v1752 = vrsqrt.pop %v1732
    %v1753 = vrsqrt.pop %v1733
    %v1754 = vrsqrt.pop %v1734
    %v1755 = vrsqrt.pop %v1735
    %v1756 = vrsqrt.pop %v1736
    %v1757 = vrsqrt.pop %v1737
    %v1758 = vrsqrt.pop %v1738
    %v1759 = vrsqrt.pop %v1739
    %v1760 = vrsqrt.pop %v1740
    %v1761 = vrsqrt.pop %v1741
    %v1762 = vrsqrt.pop %v1742
    %v1763 = vrsqrt.pop %v1743
    %v1764 = vrsqrt.pop %v1744
    %v1765 = vrsqrt.pop %v1745
    %v1766 = vrsqrt.pop %v1746
    %v1767 = vrsqrt.pop %v1747
    %v1768 = vrsqrt.pop %v1748
    %v1769 = vrsqrt.pop %v1749
    %v1770 = vrsqrt.pop %v1750
    %v1771 = vrsqrt.pop %v1751
    %v1772 = vmul.f32 %v1712, %v1752
    %v1773 = vmul.f32 %v1713, %v1753
    %v1774 = vmul.f32 %v1714, %v1754
    %v1775 = vmul.f32 %v1715, %v1755
    %v1776 = vmul.f32 %v1716, %v1756
    %v1777 = vmul.f32 %v1717, %v1757
    %v1778 = vmul.f32 %v1718, %v1758
    %v1779 = vmul.f32 %v1719, %v1759
    %v1780 = vmul.f32 %v1720, %v1760
    %v1781 = vmul.f32 %v1721, %v1761
    %v1782 = vmul.f32 %v1722, %v1762
    %v1783 = vmul.f32 %v1723, %v1763
    %v1784 = vmul.f32 %v1724, %v1764
    %v1785 = vmul.f32 %v1725, %v1765
    %v1786 = vmul.f32 %v1726, %v1766
    %v1787 = vmul.f32 %v1727, %v1767
    %v1788 = vmul.f32 %v1728, %v1768
    %v1789 = vmul.f32 %v1729, %v1769
    %v1790 = vmul.f32 %v1730, %v1770
    %v1791 = vmul.f32 %v1731, %v1771
    %v1792 = vld [vmem:[%s4] sm:$0xff]
    %v1793 = vld [vmem:[%s4 + $0x8] sm:$0xff]
    %v1794 = vld [vmem:[%s4 + $0x10] sm:$0xff]
    %v1795 = vld [vmem:[%s4 + $0x18] sm:$0xff]
    %v1796 = vld [vmem:[%s4 + $0x20] sm:$0xff]
    %v1797 = vld [vmem:[%s4 + $0x28] sm:$0xff]
    %v1798 = vld [vmem:[%s4 + $0x30] sm:$0xff]
    %v1799 = vld [vmem:[%s4 + $0x38] sm:$0xff]
    %v1800 = vld [vmem:[%s4 + $0x40] sm:$0xff]
    %v1801 = vld [vmem:[%s4 + $0x48] sm:$0xff]
    %v1802 = vld [vmem:[%s4 + $0x50] sm:$0xff]
    %v1803 = vld [vmem:[%s4 + $0x58] sm:$0xff]
    %v1804 = vld [vmem:[%s4 + $0x60] sm:$0xff]
    %v1805 = vld [vmem:[%s4 + $0x68] sm:$0xff]
    %v1806 = vld [vmem:[%s4 + $0x70] sm:$0xff]
    %v1807 = vld [vmem:[%s4 + $0x78] sm:$0xff]
    %v1808 = vld [vmem:[%s4 + $0x80] sm:$0xff]
    %v1809 = vld [vmem:[%s4 + $0x88] sm:$0xff]
    %v1810 = vld [vmem:[%s4 + $0x90] sm:$0xff]
    %v1811 = vld [vmem:[%s4 + $0x98] sm:$0xff]
    %v1812 = vmul.f32 %v1512, %v1772
    %v1813 = vmul.f32 %v1513, %v1773
    %v1814 = vmul.f32 %v1514, %v1774
    %v1815 = vmul.f32 %v1515, %v1775
    %v1816 = vmul.f32 %v1516, %v1776
    %v1817 = vmul.f32 %v1517, %v1777
    %v1818 = vmul.f32 %v1518, %v1778
    %v1819 = vmul.f32 %v1519, %v1779
    %v1820 = vmul.f32 %v1520, %v1780
    %v1821 = vmul.f32 %v1521, %v1781
    %v1822 = vmul.f32 %v1522, %v1782
    %v1823 = vmul.f32 %v1523, %v1783
    %v1824 = vmul.f32 %v1524, %v1784
    %v1825 = vmul.f32 %v1525, %v1785
    %v1826 = vmul.f32 %v1526, %v1786
    %v1827 = vmul.f32 %v1527, %v1787
    %v1828 = vmul.f32 %v1528, %v1788
    %v1829 = vmul.f32 %v1529, %v1789
    %v1830 = vmul.f32 %v1530, %v1790
    %v1831 = vmul.f32 %v1531, %v1791
    %v1832 = vsub.f32 %v1792, %v1812
    %v1833 = vsub.f32 %v1793, %v1813
    %v1834 = vsub.f32 %v1794, %v1814
    %v1835 = vsub.f32 %v1795, %v1815
    %v1836 = vsub.f32 %v1796, %v1816
    %v1837 = vsub.f32 %v1797, %v1817
    %v1838 = vsub.f32 %v1798, %v1818
    %v1839 = vsub.f32 %v1799, %v1819
    %v1840 = vsub.f32 %v1800, %v1820
    %v1841 = vsub.f32 %v1801, %v1821
    %v1842 = vsub.f32 %v1802, %v1822
    %v1843 = vsub.f32 %v1803, %v1823
    %v1844 = vsub.f32 %v1804, %v1824
    %v1845 = vsub.f32 %v1805, %v1825
    %v1846 = vsub.f32 %v1806, %v1826
    %v1847 = vsub.f32 %v1807, %v1827
    %v1848 = vsub.f32 %v1808, %v1828
    %v1849 = vsub.f32 %v1809, %v1829
    %v1850 = vsub.f32 %v1810, %v1830
    %v1851 = vsub.f32 %v1811, %v1831
    %1853 = vset.pattern.permute.xlu0 0
    %1854 = vperm.xlu0 %1853, %v1772
    %v1855 = vpop.permute.xlu0 %1854
    %1858 = vset.pattern.permute.xlu0 0
    %1859 = vperm.xlu0 %1858, %v1773
    %v1860 = vpop.permute.xlu0 %1859
    %1863 = vset.pattern.permute.xlu0 0
    %1864 = vperm.xlu0 %1863, %v1774
    %v1865 = vpop.permute.xlu0 %1864
    %1868 = vset.pattern.permute.xlu0 0
    %1869 = vperm.xlu0 %1868, %v1775
    %v1870 = vpop.permute.xlu0 %1869
    %1873 = vset.pattern.permute.xlu0 0
    %1874 = vperm.xlu0 %1873, %v1776
    %v1875 = vpop.permute.xlu0 %1874
    %1878 = vset.pattern.permute.xlu0 0
    %1879 = vperm.xlu0 %1878, %v1777
    %v1880 = vpop.permute.xlu0 %1879
    %1883 = vset.pattern.permute.xlu0 0
    %1884 = vperm.xlu0 %1883, %v1778
    %v1885 = vpop.permute.xlu0 %1884
    %1888 = vset.pattern.permute.xlu0 0
    %1889 = vperm.xlu0 %1888, %v1779
    %v1890 = vpop.permute.xlu0 %1889
    %1893 = vset.pattern.permute.xlu0 0
    %1894 = vperm.xlu0 %1893, %v1780
    %v1895 = vpop.permute.xlu0 %1894
    %1898 = vset.pattern.permute.xlu0 0
    %1899 = vperm.xlu0 %1898, %v1781
    %v1900 = vpop.permute.xlu0 %1899
    %1903 = vset.pattern.permute.xlu0 0
    %1904 = vperm.xlu0 %1903, %v1782
    %v1905 = vpop.permute.xlu0 %1904
    %1908 = vset.pattern.permute.xlu0 0
    %1909 = vperm.xlu0 %1908, %v1783
    %v1910 = vpop.permute.xlu0 %1909
    %1913 = vset.pattern.permute.xlu0 0
    %1914 = vperm.xlu0 %1913, %v1784
    %v1915 = vpop.permute.xlu0 %1914
    %1918 = vset.pattern.permute.xlu0 0
    %1919 = vperm.xlu0 %1918, %v1785
    %v1920 = vpop.permute.xlu0 %1919
    %1923 = vset.pattern.permute.xlu0 0
    %1924 = vperm.xlu0 %1923, %v1786
    %v1925 = vpop.permute.xlu0 %1924
    %1928 = vset.pattern.permute.xlu0 0
    %1929 = vperm.xlu0 %1928, %v1787
    %v1930 = vpop.permute.xlu0 %1929
    %1933 = vset.pattern.permute.xlu0 0
    %1934 = vperm.xlu0 %1933, %v1788
    %v1935 = vpop.permute.xlu0 %1934
    %1938 = vset.pattern.permute.xlu0 0
    %1939 = vperm.xlu0 %1938, %v1789
    %v1940 = vpop.permute.xlu0 %1939
    %1943 = vset.pattern.permute.xlu0 0
    %1944 = vperm.xlu0 %1943, %v1790
    %v1945 = vpop.permute.xlu0 %1944
    %1948 = vset.pattern.permute.xlu0 0
    %1949 = vperm.xlu0 %1948, %v1791
    %v1950 = vpop.permute.xlu0 %1949
    %v1952 = vmul.f32 %v1312, %v1855
    %v1953 = vmul.f32 %v1314, %v1855
    %v1954 = vmul.f32 %v1318, %v1860
    %v1955 = vmul.f32 %v1320, %v1860
    %v1956 = vmul.f32 %v1324, %v1865
    %v1957 = vmul.f32 %v1326, %v1865
    %v1958 = vmul.f32 %v1330, %v1870
    %v1959 = vmul.f32 %v1332, %v1870
    %v1960 = vmul.f32 %v1336, %v1875
    %v1961 = vmul.f32 %v1338, %v1875
    %v1962 = vmul.f32 %v1342, %v1880
    %v1963 = vmul.f32 %v1344, %v1880
    %v1964 = vmul.f32 %v1348, %v1885
    %v1965 = vmul.f32 %v1350, %v1885
    %v1966 = vmul.f32 %v1354, %v1890
    %v1967 = vmul.f32 %v1356, %v1890
    %v1968 = vmul.f32 %v1360, %v1895
    %v1969 = vmul.f32 %v1362, %v1895
    %v1970 = vmul.f32 %v1366, %v1900
    %v1971 = vmul.f32 %v1368, %v1900
    %v1972 = vmul.f32 %v1372, %v1905
    %v1973 = vmul.f32 %v1374, %v1905
    %v1974 = vmul.f32 %v1378, %v1910
    %v1975 = vmul.f32 %v1380, %v1910
    %v1976 = vmul.f32 %v1384, %v1915
    %v1977 = vmul.f32 %v1386, %v1915
    %v1978 = vmul.f32 %v1390, %v1920
    %v1979 = vmul.f32 %v1392, %v1920
    %v1980 = vmul.f32 %v1396, %v1925
    %v1981 = vmul.f32 %v1398, %v1925
    %v1982 = vmul.f32 %v1402, %v1930
    %v1983 = vmul.f32 %v1404, %v1930
    %v1984 = vmul.f32 %v1408, %v1935
    %v1985 = vmul.f32 %v1410, %v1935
    %v1986 = vmul.f32 %v1414, %v1940
    %v1987 = vmul.f32 %v1416, %v1940
    %v1988 = vmul.f32 %v1420, %v1945
    %v1989 = vmul.f32 %v1422, %v1945
    %v1990 = vmul.f32 %v1426, %v1950
    %v1991 = vmul.f32 %v1428, %v1950
    %1993 = vset.pattern.permute.xlu0 0
    %1994 = vperm.xlu0 %1993, %v1832
    %v1995 = vpop.permute.xlu0 %1994
    %1998 = vset.pattern.permute.xlu0 0
    %1999 = vperm.xlu0 %1998, %v1833
    %v2000 = vpop.permute.xlu0 %1999
    %2003 = vset.pattern.permute.xlu0 0
    %2004 = vperm.xlu0 %2003, %v1834
    %v2005 = vpop.permute.xlu0 %2004
    %2008 = vset.pattern.permute.xlu0 0
    %2009 = vperm.xlu0 %2008, %v1835
    %v2010 = vpop.permute.xlu0 %2009
    %2013 = vset.pattern.permute.xlu0 0
    %2014 = vperm.xlu0 %2013, %v1836
    %v2015 = vpop.permute.xlu0 %2014
    %2018 = vset.pattern.permute.xlu0 0
    %2019 = vperm.xlu0 %2018, %v1837
    %v2020 = vpop.permute.xlu0 %2019
    %2023 = vset.pattern.permute.xlu0 0
    %2024 = vperm.xlu0 %2023, %v1838
    %v2025 = vpop.permute.xlu0 %2024
    %2028 = vset.pattern.permute.xlu0 0
    %2029 = vperm.xlu0 %2028, %v1839
    %v2030 = vpop.permute.xlu0 %2029
    %2033 = vset.pattern.permute.xlu0 0
    %2034 = vperm.xlu0 %2033, %v1840
    %v2035 = vpop.permute.xlu0 %2034
    %2038 = vset.pattern.permute.xlu0 0
    %2039 = vperm.xlu0 %2038, %v1841
    %v2040 = vpop.permute.xlu0 %2039
    %2043 = vset.pattern.permute.xlu0 0
    %2044 = vperm.xlu0 %2043, %v1842
    %v2045 = vpop.permute.xlu0 %2044
    %2048 = vset.pattern.permute.xlu0 0
    %2049 = vperm.xlu0 %2048, %v1843
    %v2050 = vpop.permute.xlu0 %2049
    %2053 = vset.pattern.permute.xlu0 0
    %2054 = vperm.xlu0 %2053, %v1844
    %v2055 = vpop.permute.xlu0 %2054
    %2058 = vset.pattern.permute.xlu0 0
    %2059 = vperm.xlu0 %2058, %v1845
    %v2060 = vpop.permute.xlu0 %2059
    %2063 = vset.pattern.permute.xlu0 0
    %2064 = vperm.xlu0 %2063, %v1846
    %v2065 = vpop.permute.xlu0 %2064
    %2068 = vset.pattern.permute.xlu0 0
    %2069 = vperm.xlu0 %2068, %v1847
    %v2070 = vpop.permute.xlu0 %2069
    %2073 = vset.pattern.permute.xlu0 0
    %2074 = vperm.xlu0 %2073, %v1848
    %v2075 = vpop.permute.xlu0 %2074
    %2078 = vset.pattern.permute.xlu0 0
    %2079 = vperm.xlu0 %2078, %v1849
    %v2080 = vpop.permute.xlu0 %2079
    %2083 = vset.pattern.permute.xlu0 0
    %2084 = vperm.xlu0 %2083, %v1850
    %v2085 = vpop.permute.xlu0 %2084
    %2088 = vset.pattern.permute.xlu0 0
    %2089 = vperm.xlu0 %2088, %v1851
    %v2090 = vpop.permute.xlu0 %2089
    %v2092 = vadd.f32 %v1952, %v1995
    %v2093 = vadd.f32 %v1953, %v1995
    %v2094 = vadd.f32 %v1954, %v2000
    %v2095 = vadd.f32 %v1955, %v2000
    %v2096 = vadd.f32 %v1956, %v2005
    %v2097 = vadd.f32 %v1957, %v2005
    %v2098 = vadd.f32 %v1958, %v2010
    %v2099 = vadd.f32 %v1959, %v2010
    %v2100 = vadd.f32 %v1960, %v2015
    %v2101 = vadd.f32 %v1961, %v2015
    %v2102 = vadd.f32 %v1962, %v2020
    %v2103 = vadd.f32 %v1963, %v2020
    %v2104 = vadd.f32 %v1964, %v2025
    %v2105 = vadd.f32 %v1965, %v2025
    %v2106 = vadd.f32 %v1966, %v2030
    %v2107 = vadd.f32 %v1967, %v2030
    %v2108 = vadd.f32 %v1968, %v2035
    %v2109 = vadd.f32 %v1969, %v2035
    %v2110 = vadd.f32 %v1970, %v2040
    %v2111 = vadd.f32 %v1971, %v2040
    %v2112 = vadd.f32 %v1972, %v2045
    %v2113 = vadd.f32 %v1973, %v2045
    %v2114 = vadd.f32 %v1974, %v2050
    %v2115 = vadd.f32 %v1975, %v2050
    %v2116 = vadd.f32 %v1976, %v2055
    %v2117 = vadd.f32 %v1977, %v2055
    %v2118 = vadd.f32 %v1978, %v2060
    %v2119 = vadd.f32 %v1979, %v2060
    %v2120 = vadd.f32 %v1980, %v2065
    %v2121 = vadd.f32 %v1981, %v2065
    %v2122 = vadd.f32 %v1982, %v2070
    %v2123 = vadd.f32 %v1983, %v2070
    %v2124 = vadd.f32 %v1984, %v2075
    %v2125 = vadd.f32 %v1985, %v2075
    %v2126 = vadd.f32 %v1986, %v2080
    %v2127 = vadd.f32 %v1987, %v2080
    %v2128 = vadd.f32 %v1988, %v2085
    %v2129 = vadd.f32 %v1989, %v2085
    %v2130 = vadd.f32 %v1990, %v2090
    %v2131 = vadd.f32 %v1991, %v2090
    %2132 = vst [vmem:[#allocation2] sm:$0xff] %v2092
    %2133 = vst.msk [vmem:[#allocation2 + $0x8] sm:$0xff] %vm1430, %v2093
    %2134 = vst [vmem:[#allocation2 + $0x10] sm:$0xff] %v2094
    %2135 = vst.msk [vmem:[#allocation2 + $0x18] sm:$0xff] %vm1430, %v2095
    %2136 = vst [vmem:[#allocation2 + $0x20] sm:$0xff] %v2096
    %2137 = vst.msk [vmem:[#allocation2 + $0x28] sm:$0xff] %vm1430, %v2097
    %2138 = vst [vmem:[#allocation2 + $0x30] sm:$0xff] %v2098
    %2139 = vst.msk [vmem:[#allocation2 + $0x38] sm:$0xff] %vm1430, %v2099
    %2140 = vst [vmem:[#allocation2 + $0x40] sm:$0xff] %v2100
    %2141 = vst.msk [vmem:[#allocation2 + $0x48] sm:$0xff] %vm1430, %v2101
    %2142 = vst [vmem:[#allocation2 + $0x50] sm:$0xff] %v2102
    %2143 = vst.msk [vmem:[#allocation2 + $0x58] sm:$0xff] %vm1430, %v2103
    %2144 = vst [vmem:[#allocation2 + $0x60] sm:$0xff] %v2104
    %2145 = vst.msk [vmem:[#allocation2 + $0x68] sm:$0xff] %vm1430, %v2105
    %2146 = vst [vmem:[#allocation2 + $0x70] sm:$0xff] %v2106
    %2147 = vst.msk [vmem:[#allocation2 + $0x78] sm:$0xff] %vm1430, %v2107
    %2148 = vst [vmem:[#allocation2 + $0x80] sm:$0xff] %v2108
    %2149 = vst.msk [vmem:[#allocation2 + $0x88] sm:$0xff] %vm1430, %v2109
    %2150 = vst [vmem:[#allocation2 + $0x90] sm:$0xff] %v2110
    %2151 = vst.msk [vmem:[#allocation2 + $0x98] sm:$0xff] %vm1430, %v2111
    %2152 = vst [vmem:[#allocation2 + $0xa0] sm:$0xff] %v2112
    %2153 = vst.msk [vmem:[#allocation2 + $0xa8] sm:$0xff] %vm1430, %v2113
    %2154 = vst [vmem:[#allocation2 + $0xb0] sm:$0xff] %v2114
    %2155 = vst.msk [vmem:[#allocation2 + $0xb8] sm:$0xff] %vm1430, %v2115
    %2156 = vst [vmem:[#allocation2 + $0xc0] sm:$0xff] %v2116
    %2157 = vst.msk [vmem:[#allocation2 + $0xc8] sm:$0xff] %vm1430, %v2117
    %2158 = vst [vmem:[#allocation2 + $0xd0] sm:$0xff] %v2118
    %2159 = vst.msk [vmem:[#allocation2 + $0xd8] sm:$0xff] %vm1430, %v2119
    %2160 = vst [vmem:[#allocation2 + $0xe0] sm:$0xff] %v2120
    %2161 = vst.msk [vmem:[#allocation2 + $0xe8] sm:$0xff] %vm1430, %v2121
    %2162 = vst [vmem:[#allocation2 + $0xf0] sm:$0xff] %v2122
    %2163 = vst.msk [vmem:[#allocation2 + $0xf8] sm:$0xff] %vm1430, %v2123
    %2164 = vst [vmem:[#allocation2 + $0x100] sm:$0xff] %v2124
    %2165 = vst.msk [vmem:[#allocation2 + $0x108] sm:$0xff] %vm1430, %v2125
    %2166 = vst [vmem:[#allocation2 + $0x110] sm:$0xff] %v2126
    %2167 = vst.msk [vmem:[#allocation2 + $0x118] sm:$0xff] %vm1430, %v2127
    %2168 = vst [vmem:[#allocation2 + $0x120] sm:$0xff] %v2128
    %2169 = vst.msk [vmem:[#allocation2 + $0x128] sm:$0xff] %vm1430, %v2129
    %2170 = vst [vmem:[#allocation2 + $0x130] sm:$0xff] %v2130
    %2171 = vst.msk [vmem:[#allocation2 + $0x138] sm:$0xff] %vm1430, %v2131
    // Predicated region
    $region22: #{tpu_custom_call.1} parent=1 // pred_check
      _
    $region23: #{tpu_custom_call.1} parent=1 // pred_check_branch
      %2173 = sbr.rel (0) target = $region25
    $region24: #{tpu_custom_call.1} parent=1 // pred_region
      %s2175 = ssub.s32 5120, 5120
      %2176 = vsyncadd [#allocation3], %s2175
      %s2177 = sshll.u32 [#allocation2], 4
      %s2178 = int_to_ptr.vmem [resolvable:$true] %s2177
      %2183 = dma.vmem_to_hbm [thread:$0]  %s2178, 5120, %s5, [#allocation3], 256, 256, 16
    $region25: #{tpu_custom_call.1} parent=1 // pred_fallthru
      _
    // Predicated region
    $region26: #{tpu_custom_call.1} parent=1 // pred_check
      _
    $region27: #{tpu_custom_call.1} parent=1 // pred_check_branch
      %2185 = sbr.rel (0) target = $region29
    $region28: #{tpu_custom_call.1} parent=1 // pred_region
      %2186 = dma.done [#allocation3], 5120
    $region29: #{tpu_custom_call.1} parent=1 // pred_fallthru
      _
    %2187 = vsyncpa [#allocation3], 1

</llo_original>
